<compile_context>
chip_gen: v7x
topology: tpu7x:2x2x1
jax: 0.10.0
libtpu: 0.0.40
codegen_flags: <defaults>
</compile_context>

<pallas_src>
import functools

import numpy as np

import jax
import jax.numpy as jnp
from jax import lax
from jax.experimental import pallas as pl
from jax.experimental.pallas import tpu as pltpu


# The 8 non-centre taps of a 3x3 window, in a fixed order shared by the
# host-side mask table and the in-kernel accumulation loop.
_TAPS = tuple((dy, dx) for dy in range(3) for dx in range(3) if (dy, dx) != (1, 1))


@functools.cache
def _use_hw_roll() -> bool:
    """Use pltpu.roll (XLU lane rotate) on real TPU; jnp.roll elsewhere
    (e.g. CPU interpret-mode checking)."""
    try:
        return jax.default_backend() == "tpu"
    except Exception:
        return False


@functools.cache
def _tensorcores_per_device() -> int:
    """2 for dual-TensorCore chips (v4 megacore, v7x); 1 otherwise (v5e/v6e)."""
    try:
        dev = jax.devices()[0]
        if dev.platform != "tpu":
            return 1
        kind = dev.device_kind.lower()
    except Exception:
        return 1
    return 2 if ("v4" in kind or "v7" in kind or "7x" in kind) else 1


def iel_kernel(mask_ref, x_ref, w_in_ref, w_dw_ref, w_dw12_ref, w_out_ref,
               o_ref, *, W, hp, use_hw_roll):
    x = x_ref[...]                                     # (dim, L), lane-dense
    L = x.shape[-1]

    # project_in: ONE fused MXU pass covering both chunk halves.
    y = jnp.dot(w_in_ref[...], x, preferred_element_type=jnp.float32)  # (2*hp, L)

    masks = mask_ref[...]                              # (8, L) 0/1 f32, precomputed

    def shift_lanes(v, d):
        # out[:, p] = v[:, (p + d) % L]; wrapped positions are zeroed by masks.
        s = (-d) % L
        if s == 0:
            return v
        if use_hw_roll:
            return pltpu.roll(v, s, 1)                 # XLU lane rotation
        return jnp.roll(v, s, axis=1)                  # interpret-mode fallback

    def dwconv3x3(z, w_taps_ref):
        """Depthwise 3x3, padding=1, on z:(C, L); per-tap scalars w:(C, 9)."""
        w = w_taps_ref[...]                            # loaded once
        acc = z * w[:, 4:5]                            # centre tap init (no memset)
        for t, (dy, dx) in enumerate(_TAPS):
            d = (dy - 1) * W + (dx - 1)                # flat-index offset of the tap
            tap = shift_lanes(z, d) * masks[t:t + 1, :]
            acc = acc + tap * w[:, dy * 3 + dx:dy * 3 + dx + 1]
        return acc

    # Both chunk halves live in one (2*hp, L) tile -> one fused dwconv each.
    z = dwconv3x3(y, w_dw_ref)                         # self.dwconv
    u = jnp.tanh(dwconv3x3(z, w_dw12_ref)) + z         # dwconv1/dwconv2 + tanh + skip
    prod = u[:hp] * u[hp:]                             # x1 * x2 (sublane-aligned split)

    # project_out: single MXU pass; lane-dense (dim, L) store.
    out = jnp.dot(w_out_ref[...], prod, preferred_element_type=jnp.float32)
    o_ref[...] = out.astype(o_ref.dtype)
    # TODO(synk): on v6e/v7x carry y/z/u in bfloat16 (bf16 VPU/EUP); skipped to
    # keep the 1e-4 comparison against the f32 reference.


def pack_iel_params(params):
    """One-time (init-time) weight packing into the kernel's fused layout.

    Both chunk halves are padded to hp = round_up(hidden, 8) rows so every
    in-kernel channel split is sublane-aligned; padded rows/cols are zero, so
    they stay zero through dwconv/tanh/product and add nothing to project_out.
    Call once and reuse — this must NOT sit on the per-forward hot path.
    """
    w_in, w_dw, w_dw1, w_dw2, w_out = params
    dim, two_hidden = w_in.shape
    hidden = two_hidden // 2
    hp = ((hidden + 7) // 8) * 8

    def taps(w):                                       # (3, 3, C) -> (C, 9)
        return w.reshape(9, w.shape[-1]).T

    w_in_p = jnp.zeros((2 * hp, dim), jnp.float32)
    w_in_p = w_in_p.at[:hidden].set(w_in[:, :hidden].T)
    w_in_p = w_in_p.at[hp:hp + hidden].set(w_in[:, hidden:].T)

    w_dw_p = jnp.zeros((2 * hp, 9), jnp.float32)
    w_dw_p = w_dw_p.at[:hidden].set(taps(w_dw[..., :hidden]))
    w_dw_p = w_dw_p.at[hp:hp + hidden].set(taps(w_dw[..., hidden:]))

    w_dw12_p = jnp.zeros((2 * hp, 9), jnp.float32)
    w_dw12_p = w_dw12_p.at[:hidden].set(taps(w_dw1))
    w_dw12_p = w_dw12_p.at[hp:hp + hidden].set(taps(w_dw2))

    w_out_p = jnp.zeros((dim, hp), jnp.float32)
    w_out_p = w_out_p.at[:, :hidden].set(w_out.T)

    # TODO(synk): a tight 2*hidden-row packing (24 rows instead of 32 here)
    # would trim ~25% of the dwconv VALU work but needs a sublane-unaligned
    # split before the x1*x2 product; kept aligned for lowering robustness.
    return w_in_p, w_dw_p, w_dw12_p, w_out_p


def _boundary_masks(H, W, lanes):
    """(8, lanes) f32 validity mask per non-centre tap (trace-time constant).

    lanes = B*H*W with batch folded onto the lane axis; the masks are periodic
    in H*W, so any roll wrap-around across a sample boundary is zeroed.
    """
    HW = H * W
    q = np.arange(lanes) % HW
    h, w = q // W, q % W
    rows = []
    for dy, dx in _TAPS:
        oy, ox = dy - 1, dx - 1
        rows.append((h + oy >= 0) & (h + oy < H) & (w + ox >= 0) & (w + ox < W))
    return np.stack(rows).astype(np.float32)


@jax.jit
def iel_forward(x_nchw, packed_params):
    """x_nchw: (B, dim, H, W) float32; packed_params from pack_iel_params()."""
    w_in_p, w_dw_p, w_dw12_p, w_out_p = packed_params
    B, dim, H, W = x_nchw.shape
    hp = w_in_p.shape[0] // 2
    HW = H * W
    lanes = B * HW

    # Fold batch onto the lane axis: channel-major, lane-dense (dim, B*H*W).
    x_flat = jnp.transpose(x_nchw.reshape(B, dim, HW), (1, 0, 2)).reshape(dim, lanes)
    masks = _boundary_masks(H, W, lanes)               # numpy -> baked-in constant

    # One grid step on single-TC chips (v5e/v6e, avoids per-step overhead);
    # two "parallel" steps on dual-TC chips (v4 megacore / v7x).
    grid = 1
    if _tensorcores_per_device() >= 2 and B % 2 == 0 and (lanes // 2) % 128 == 0:
        grid = 2
    Lc = lanes // grid

    kern = functools.partial(iel_kernel, W=W, hp=hp, use_hw_roll=_use_hw_roll())
    full = lambda shape: pl.BlockSpec(shape, lambda g: (0, 0))

    # TODO(synk): for large H*W add an H-tile grid axis (1-row halo); on v7x
    # size it against the 64 MiB physical / 32 MiB scoped VMEM budget.
    out_flat = pl.pallas_call(
        kern,
        out_shape=jax.ShapeDtypeStruct((dim, lanes), x_nchw.dtype),
        grid=(grid,),
        in_specs=[
            pl.BlockSpec((8, Lc), lambda g: (0, g)),       # boundary masks
            pl.BlockSpec((dim, Lc), lambda g: (0, g)),     # input tile
            full(w_in_p.shape),
            full(w_dw_p.shape),
            full(w_dw12_p.shape),
            full(w_out_p.shape),
        ],
        out_specs=pl.BlockSpec((dim, Lc), lambda g: (0, g)),
        compiler_params=pltpu.CompilerParams(dimension_semantics=("parallel",)),
    )(masks, x_flat, w_in_p, w_dw_p, w_dw12_p, w_out_p)

    return jnp.transpose(out_flat.reshape(dim, B, HW), (1, 0, 2)).reshape(B, dim, H, W)


def iel_reference(x_nchw, params):
    """Pure-JAX (lax.conv) reference matching the PyTorch module."""
    w_in, w_dw, w_dw1, w_dw2, w_out = params
    hidden = w_out.shape[0]
    dn = ('NCHW', 'OIHW', 'NCHW')

    def conv1x1(x, w_mat):                                  # w_mat: (cin, cout)
        w = jnp.transpose(w_mat)[:, :, None, None]          # (cout, cin, 1, 1)
        return lax.conv_general_dilated(x, w, (1, 1), 'SAME',
                                        dimension_numbers=dn)

    def dwconv(x, w_hwc):                                   # w_hwc: (3, 3, C)
        C = w_hwc.shape[-1]
        w = jnp.transpose(w_hwc, (2, 0, 1))[:, None, :, :]  # (C, 1, 3, 3)
        return lax.conv_general_dilated(x, w, (1, 1), 'SAME',
                                        dimension_numbers=dn,
                                        feature_group_count=C)

    y = conv1x1(x_nchw, w_in)
    z = dwconv(y, w_dw)
    x1, x2 = z[:, :hidden], z[:, hidden:]
    x1 = jnp.tanh(dwconv(x1, w_dw1)) + x1
    x2 = jnp.tanh(dwconv(x2, w_dw2)) + x2
    return conv1x1(x1 * x2, w_out)


if __name__ == "__main__":
    B, dim, H, W = 2, 4, 16, 16
    hidden = int(dim * 2.66)                                # = 10

    key = jax.random.PRNGKey(0)
    k = jax.random.split(key, 6)
    x = jax.random.normal(k[0], (B, dim, H, W), jnp.float32)

    # Deterministic synthetic parameters (bias=False in the module).
    w_in = 0.2 * jax.random.normal(k[1], (dim, 2 * hidden), jnp.float32)
    w_dw = 0.2 * jax.random.normal(k[2], (3, 3, 2 * hidden), jnp.float32)
    w_dw1 = 0.2 * jax.random.normal(k[3], (3, 3, hidden), jnp.float32)
    w_dw2 = 0.2 * jax.random.normal(k[4], (3, 3, hidden), jnp.float32)
    w_out = 0.2 * jax.random.normal(k[5], (hidden, dim), jnp.float32)
    params = (w_in, w_dw, w_dw1, w_dw2, w_out)

    packed = pack_iel_params(params)        # one-time init-cost, off the hot path

    out = jax.block_until_ready(iel_forward(x, packed))
    ref = jax.block_until_ready(iel_reference(x, params))

    assert out.shape == (B, dim, H, W), out.shape
    if not jnp.allclose(out, ref, rtol=1e-4, atol=1e-4):
        max_err = float(jnp.max(jnp.abs(out - ref)))
        raise AssertionError(f"mismatch vs reference, max abs err = {max_err}")

    print("KERNEL_OK")
</pallas_src>

<mosaic_0001>
module attributes {stable_mosaic.version = 11 : i64} {
  func.func @iel_kernel(%arg0: i32, %arg1: memref<8x512xf32, #tpu.memory_space<vmem>>, %arg2: memref<4x512xf32, #tpu.memory_space<vmem>>, %arg3: memref<32x4xf32, #tpu.memory_space<vmem>>, %arg4: memref<32x9xf32, #tpu.memory_space<vmem>>, %arg5: memref<32x9xf32, #tpu.memory_space<vmem>>, %arg6: memref<4x16xf32, #tpu.memory_space<vmem>>, %arg7: memref<4x512xf32, #tpu.memory_space<vmem>>) attributes {dimension_semantics = [#tpu.dimension_semantics<parallel>], iteration_bounds = array<i64: 1>, scalar_prefetch = 0 : i64, scratch_operands = 0 : i64, tpu.core_type = #tpu.core_type<tc>, window_params = [{transform_indices = @transform_0, window_bounds = array<i64: 8, 512>}, {transform_indices = @transform_1, window_bounds = array<i64: 4, 512>}, {pipeline_mode = #tpu.pipeline_mode<synchronous>, transform_indices = @transform_2, window_bounds = array<i64: 32, 4>}, {pipeline_mode = #tpu.pipeline_mode<synchronous>, transform_indices = @transform_3, window_bounds = array<i64: 32, 9>}, {pipeline_mode = #tpu.pipeline_mode<synchronous>, transform_indices = @transform_4, window_bounds = array<i64: 32, 9>}, {pipeline_mode = #tpu.pipeline_mode<synchronous>, transform_indices = @transform_5, window_bounds = array<i64: 4, 16>}, {transform_indices = @transform_6, window_bounds = array<i64: 4, 512>}]} {
    %c0 = arith.constant 0 : index
    %c0_0 = arith.constant 0 : index
    %0 = vector.load %arg2[%c0, %c0_0] : memref<4x512xf32, #tpu.memory_space<vmem>>, vector<4x512xf32>
    %c0_1 = arith.constant 0 : index
    %c0_2 = arith.constant 0 : index
    %1 = vector.load %arg3[%c0_1, %c0_2] : memref<32x4xf32, #tpu.memory_space<vmem>>, vector<32x4xf32>
    %cst = arith.constant dense<0.000000e+00> : vector<32x512xf32>
    %2 = tpu.matmul %1, %0, %cst {dimension_numbers = #tpu.dot_dimension_numbers<[1], [0], [0], [1], [0, 0, 1, 1], [], []>} : vector<32x4xf32>, vector<4x512xf32>, vector<32x512xf32> -> vector<32x512xf32>
    %c0_3 = arith.constant 0 : index
    %c0_4 = arith.constant 0 : index
    %3 = vector.load %arg1[%c0_3, %c0_4] : memref<8x512xf32, #tpu.memory_space<vmem>>, vector<8x512xf32>
    %c0_5 = arith.constant 0 : index
    %c0_6 = arith.constant 0 : index
    %4 = vector.load %arg4[%c0_5, %c0_6] : memref<32x9xf32, #tpu.memory_space<vmem>>, vector<32x9xf32>
    %5 = vector.extract_strided_slice %4 {offsets = [0, 4], sizes = [32, 1], strides = [1, 1]} : vector<32x9xf32> to vector<32x1xf32>
    %6 = vector.broadcast %5 : vector<32x1xf32> to vector<32x512xf32>
    %7 = arith.mulf %2, %6 : vector<32x512xf32>
    %8 = vector.extract_strided_slice %2 {offsets = [0, 495], sizes = [32, 17], strides = [1, 1]} : vector<32x512xf32> to vector<32x17xf32>
    %9 = vector.extract_strided_slice %2 {offsets = [0, 0], sizes = [32, 495], strides = [1, 1]} : vector<32x512xf32> to vector<32x495xf32>
    %10 = tpu.concatenate %8, %9 in 1 : vector<32x17xf32>, vector<32x495xf32> -> vector<32x512xf32>
    %11 = vector.extract_strided_slice %3 {offsets = [0, 0], sizes = [1, 512], strides = [1, 1]} : vector<8x512xf32> to vector<1x512xf32>
    %12 = vector.broadcast %11 : vector<1x512xf32> to vector<32x512xf32>
    %13 = arith.mulf %10, %12 : vector<32x512xf32>
    %14 = vector.extract_strided_slice %4 {offsets = [0, 0], sizes = [32, 1], strides = [1, 1]} : vector<32x9xf32> to vector<32x1xf32>
    %15 = vector.broadcast %14 : vector<32x1xf32> to vector<32x512xf32>
    %16 = arith.mulf %13, %15 : vector<32x512xf32>
    %17 = arith.addf %7, %16 : vector<32x512xf32>
    %18 = vector.extract_strided_slice %2 {offsets = [0, 496], sizes = [32, 16], strides = [1, 1]} : vector<32x512xf32> to vector<32x16xf32>
    %19 = vector.extract_strided_slice %2 {offsets = [0, 0], sizes = [32, 496], strides = [1, 1]} : vector<32x512xf32> to vector<32x496xf32>
    %20 = tpu.concatenate %18, %19 in 1 : vector<32x16xf32>, vector<32x496xf32> -> vector<32x512xf32>
    %21 = vector.extract_strided_slice %3 {offsets = [1, 0], sizes = [1, 512], strides = [1, 1]} : vector<8x512xf32> to vector<1x512xf32>
    %22 = vector.broadcast %21 : vector<1x512xf32> to vector<32x512xf32>
    %23 = arith.mulf %20, %22 : vector<32x512xf32>
    %24 = vector.extract_strided_slice %4 {offsets = [0, 1], sizes = [32, 1], strides = [1, 1]} : vector<32x9xf32> to vector<32x1xf32>
    %25 = vector.broadcast %24 : vector<32x1xf32> to vector<32x512xf32>
    %26 = arith.mulf %23, %25 : vector<32x512xf32>
    %27 = arith.addf %17, %26 : vector<32x512xf32>
    %28 = vector.extract_strided_slice %2 {offsets = [0, 497], sizes = [32, 15], strides = [1, 1]} : vector<32x512xf32> to vector<32x15xf32>
    %29 = vector.extract_strided_slice %2 {offsets = [0, 0], sizes = [32, 497], strides = [1, 1]} : vector<32x512xf32> to vector<32x497xf32>
    %30 = tpu.concatenate %28, %29 in 1 : vector<32x15xf32>, vector<32x497xf32> -> vector<32x512xf32>
    %31 = vector.extract_strided_slice %3 {offsets = [2, 0], sizes = [1, 512], strides = [1, 1]} : vector<8x512xf32> to vector<1x512xf32>
    %32 = vector.broadcast %31 : vector<1x512xf32> to vector<32x512xf32>
    %33 = arith.mulf %30, %32 : vector<32x512xf32>
    %34 = vector.extract_strided_slice %4 {offsets = [0, 2], sizes = [32, 1], strides = [1, 1]} : vector<32x9xf32> to vector<32x1xf32>
    %35 = vector.broadcast %34 : vector<32x1xf32> to vector<32x512xf32>
    %36 = arith.mulf %33, %35 : vector<32x512xf32>
    %37 = arith.addf %27, %36 : vector<32x512xf32>
    %38 = vector.extract_strided_slice %2 {offsets = [0, 511], sizes = [32, 1], strides = [1, 1]} : vector<32x512xf32> to vector<32x1xf32>
    %39 = vector.extract_strided_slice %2 {offsets = [0, 0], sizes = [32, 511], strides = [1, 1]} : vector<32x512xf32> to vector<32x511xf32>
    %40 = tpu.concatenate %38, %39 in 1 : vector<32x1xf32>, vector<32x511xf32> -> vector<32x512xf32>
    %41 = vector.extract_strided_slice %3 {offsets = [3, 0], sizes = [1, 512], strides = [1, 1]} : vector<8x512xf32> to vector<1x512xf32>
    %42 = vector.broadcast %41 : vector<1x512xf32> to vector<32x512xf32>
    %43 = arith.mulf %40, %42 : vector<32x512xf32>
    %44 = vector.extract_strided_slice %4 {offsets = [0, 3], sizes = [32, 1], strides = [1, 1]} : vector<32x9xf32> to vector<32x1xf32>
    %45 = vector.broadcast %44 : vector<32x1xf32> to vector<32x512xf32>
    %46 = arith.mulf %43, %45 : vector<32x512xf32>
    %47 = arith.addf %37, %46 : vector<32x512xf32>
    %48 = vector.extract_strided_slice %2 {offsets = [0, 1], sizes = [32, 511], strides = [1, 1]} : vector<32x512xf32> to vector<32x511xf32>
    %49 = vector.extract_strided_slice %2 {offsets = [0, 0], sizes = [32, 1], strides = [1, 1]} : vector<32x512xf32> to vector<32x1xf32>
    %50 = tpu.concatenate %48, %49 in 1 : vector<32x511xf32>, vector<32x1xf32> -> vector<32x512xf32>
    %51 = vector.extract_strided_slice %3 {offsets = [4, 0], sizes = [1, 512], strides = [1, 1]} : vector<8x512xf32> to vector<1x512xf32>
    %52 = vector.broadcast %51 : vector<1x512xf32> to vector<32x512xf32>
    %53 = arith.mulf %50, %52 : vector<32x512xf32>
    %54 = vector.extract_strided_slice %4 {offsets = [0, 5], sizes = [32, 1], strides = [1, 1]} : vector<32x9xf32> to vector<32x1xf32>
    %55 = vector.broadcast %54 : vector<32x1xf32> to vector<32x512xf32>
    %56 = arith.mulf %53, %55 : vector<32x512xf32>
    %57 = arith.addf %47, %56 : vector<32x512xf32>
    %58 = vector.extract_strided_slice %2 {offsets = [0, 15], sizes = [32, 497], strides = [1, 1]} : vector<32x512xf32> to vector<32x497xf32>
    %59 = vector.extract_strided_slice %2 {offsets = [0, 0], sizes = [32, 15], strides = [1, 1]} : vector<32x512xf32> to vector<32x15xf32>
    %60 = tpu.concatenate %58, %59 in 1 : vector<32x497xf32>, vector<32x15xf32> -> vector<32x512xf32>
    %61 = vector.extract_strided_slice %3 {offsets = [5, 0], sizes = [1, 512], strides = [1, 1]} : vector<8x512xf32> to vector<1x512xf32>
    %62 = vector.broadcast %61 : vector<1x512xf32> to vector<32x512xf32>
    %63 = arith.mulf %60, %62 : vector<32x512xf32>
    %64 = vector.extract_strided_slice %4 {offsets = [0, 6], sizes = [32, 1], strides = [1, 1]} : vector<32x9xf32> to vector<32x1xf32>
    %65 = vector.broadcast %64 : vector<32x1xf32> to vector<32x512xf32>
    %66 = arith.mulf %63, %65 : vector<32x512xf32>
    %67 = arith.addf %57, %66 : vector<32x512xf32>
    %68 = vector.extract_strided_slice %2 {offsets = [0, 16], sizes = [32, 496], strides = [1, 1]} : vector<32x512xf32> to vector<32x496xf32>
    %69 = vector.extract_strided_slice %2 {offsets = [0, 0], sizes = [32, 16], strides = [1, 1]} : vector<32x512xf32> to vector<32x16xf32>
    %70 = tpu.concatenate %68, %69 in 1 : vector<32x496xf32>, vector<32x16xf32> -> vector<32x512xf32>
    %71 = vector.extract_strided_slice %3 {offsets = [6, 0], sizes = [1, 512], strides = [1, 1]} : vector<8x512xf32> to vector<1x512xf32>
    %72 = vector.broadcast %71 : vector<1x512xf32> to vector<32x512xf32>
    %73 = arith.mulf %70, %72 : vector<32x512xf32>
    %74 = vector.extract_strided_slice %4 {offsets = [0, 7], sizes = [32, 1], strides = [1, 1]} : vector<32x9xf32> to vector<32x1xf32>
    %75 = vector.broadcast %74 : vector<32x1xf32> to vector<32x512xf32>
    %76 = arith.mulf %73, %75 : vector<32x512xf32>
    %77 = arith.addf %67, %76 : vector<32x512xf32>
    %78 = vector.extract_strided_slice %2 {offsets = [0, 17], sizes = [32, 495], strides = [1, 1]} : vector<32x512xf32> to vector<32x495xf32>
    %79 = vector.extract_strided_slice %2 {offsets = [0, 0], sizes = [32, 17], strides = [1, 1]} : vector<32x512xf32> to vector<32x17xf32>
    %80 = tpu.concatenate %78, %79 in 1 : vector<32x495xf32>, vector<32x17xf32> -> vector<32x512xf32>
    %81 = vector.extract_strided_slice %3 {offsets = [7, 0], sizes = [1, 512], strides = [1, 1]} : vector<8x512xf32> to vector<1x512xf32>
    %82 = vector.broadcast %81 : vector<1x512xf32> to vector<32x512xf32>
    %83 = arith.mulf %80, %82 : vector<32x512xf32>
    %84 = vector.extract_strided_slice %4 {offsets = [0, 8], sizes = [32, 1], strides = [1, 1]} : vector<32x9xf32> to vector<32x1xf32>
    %85 = vector.broadcast %84 : vector<32x1xf32> to vector<32x512xf32>
    %86 = arith.mulf %83, %85 : vector<32x512xf32>
    %87 = arith.addf %77, %86 : vector<32x512xf32>
    %c0_7 = arith.constant 0 : index
    %c0_8 = arith.constant 0 : index
    %88 = vector.load %arg5[%c0_7, %c0_8] : memref<32x9xf32, #tpu.memory_space<vmem>>, vector<32x9xf32>
    %89 = vector.extract_strided_slice %88 {offsets = [0, 4], sizes = [32, 1], strides = [1, 1]} : vector<32x9xf32> to vector<32x1xf32>
    %90 = vector.broadcast %89 : vector<32x1xf32> to vector<32x512xf32>
    %91 = arith.mulf %87, %90 : vector<32x512xf32>
    %92 = vector.extract_strided_slice %87 {offsets = [0, 495], sizes = [32, 17], strides = [1, 1]} : vector<32x512xf32> to vector<32x17xf32>
    %93 = vector.extract_strided_slice %87 {offsets = [0, 0], sizes = [32, 495], strides = [1, 1]} : vector<32x512xf32> to vector<32x495xf32>
    %94 = tpu.concatenate %92, %93 in 1 : vector<32x17xf32>, vector<32x495xf32> -> vector<32x512xf32>
    %95 = vector.extract_strided_slice %3 {offsets = [0, 0], sizes = [1, 512], strides = [1, 1]} : vector<8x512xf32> to vector<1x512xf32>
    %96 = vector.broadcast %95 : vector<1x512xf32> to vector<32x512xf32>
    %97 = arith.mulf %94, %96 : vector<32x512xf32>
    %98 = vector.extract_strided_slice %88 {offsets = [0, 0], sizes = [32, 1], strides = [1, 1]} : vector<32x9xf32> to vector<32x1xf32>
    %99 = vector.broadcast %98 : vector<32x1xf32> to vector<32x512xf32>
    %100 = arith.mulf %97, %99 : vector<32x512xf32>
    %101 = arith.addf %91, %100 : vector<32x512xf32>
    %102 = vector.extract_strided_slice %87 {offsets = [0, 496], sizes = [32, 16], strides = [1, 1]} : vector<32x512xf32> to vector<32x16xf32>
    %103 = vector.extract_strided_slice %87 {offsets = [0, 0], sizes = [32, 496], strides = [1, 1]} : vector<32x512xf32> to vector<32x496xf32>
    %104 = tpu.concatenate %102, %103 in 1 : vector<32x16xf32>, vector<32x496xf32> -> vector<32x512xf32>
    %105 = vector.extract_strided_slice %3 {offsets = [1, 0], sizes = [1, 512], strides = [1, 1]} : vector<8x512xf32> to vector<1x512xf32>
    %106 = vector.broadcast %105 : vector<1x512xf32> to vector<32x512xf32>
    %107 = arith.mulf %104, %106 : vector<32x512xf32>
    %108 = vector.extract_strided_slice %88 {offsets = [0, 1], sizes = [32, 1], strides = [1, 1]} : vector<32x9xf32> to vector<32x1xf32>
    %109 = vector.broadcast %108 : vector<32x1xf32> to vector<32x512xf32>
    %110 = arith.mulf %107, %109 : vector<32x512xf32>
    %111 = arith.addf %101, %110 : vector<32x512xf32>
    %112 = vector.extract_strided_slice %87 {offsets = [0, 497], sizes = [32, 15], strides = [1, 1]} : vector<32x512xf32> to vector<32x15xf32>
    %113 = vector.extract_strided_slice %87 {offsets = [0, 0], sizes = [32, 497], strides = [1, 1]} : vector<32x512xf32> to vector<32x497xf32>
    %114 = tpu.concatenate %112, %113 in 1 : vector<32x15xf32>, vector<32x497xf32> -> vector<32x512xf32>
    %115 = vector.extract_strided_slice %3 {offsets = [2, 0], sizes = [1, 512], strides = [1, 1]} : vector<8x512xf32> to vector<1x512xf32>
    %116 = vector.broadcast %115 : vector<1x512xf32> to vector<32x512xf32>
    %117 = arith.mulf %114, %116 : vector<32x512xf32>
    %118 = vector.extract_strided_slice %88 {offsets = [0, 2], sizes = [32, 1], strides = [1, 1]} : vector<32x9xf32> to vector<32x1xf32>
    %119 = vector.broadcast %118 : vector<32x1xf32> to vector<32x512xf32>
    %120 = arith.mulf %117, %119 : vector<32x512xf32>
    %121 = arith.addf %111, %120 : vector<32x512xf32>
    %122 = vector.extract_strided_slice %87 {offsets = [0, 511], sizes = [32, 1], strides = [1, 1]} : vector<32x512xf32> to vector<32x1xf32>
    %123 = vector.extract_strided_slice %87 {offsets = [0, 0], sizes = [32, 511], strides = [1, 1]} : vector<32x512xf32> to vector<32x511xf32>
    %124 = tpu.concatenate %122, %123 in 1 : vector<32x1xf32>, vector<32x511xf32> -> vector<32x512xf32>
    %125 = vector.extract_strided_slice %3 {offsets = [3, 0], sizes = [1, 512], strides = [1, 1]} : vector<8x512xf32> to vector<1x512xf32>
    %126 = vector.broadcast %125 : vector<1x512xf32> to vector<32x512xf32>
    %127 = arith.mulf %124, %126 : vector<32x512xf32>
    %128 = vector.extract_strided_slice %88 {offsets = [0, 3], sizes = [32, 1], strides = [1, 1]} : vector<32x9xf32> to vector<32x1xf32>
    %129 = vector.broadcast %128 : vector<32x1xf32> to vector<32x512xf32>
    %130 = arith.mulf %127, %129 : vector<32x512xf32>
    %131 = arith.addf %121, %130 : vector<32x512xf32>
    %132 = vector.extract_strided_slice %87 {offsets = [0, 1], sizes = [32, 511], strides = [1, 1]} : vector<32x512xf32> to vector<32x511xf32>
    %133 = vector.extract_strided_slice %87 {offsets = [0, 0], sizes = [32, 1], strides = [1, 1]} : vector<32x512xf32> to vector<32x1xf32>
    %134 = tpu.concatenate %132, %133 in 1 : vector<32x511xf32>, vector<32x1xf32> -> vector<32x512xf32>
    %135 = vector.extract_strided_slice %3 {offsets = [4, 0], sizes = [1, 512], strides = [1, 1]} : vector<8x512xf32> to vector<1x512xf32>
    %136 = vector.broadcast %135 : vector<1x512xf32> to vector<32x512xf32>
    %137 = arith.mulf %134, %136 : vector<32x512xf32>
    %138 = vector.extract_strided_slice %88 {offsets = [0, 5], sizes = [32, 1], strides = [1, 1]} : vector<32x9xf32> to vector<32x1xf32>
    %139 = vector.broadcast %138 : vector<32x1xf32> to vector<32x512xf32>
    %140 = arith.mulf %137, %139 : vector<32x512xf32>
    %141 = arith.addf %131, %140 : vector<32x512xf32>
    %142 = vector.extract_strided_slice %87 {offsets = [0, 15], sizes = [32, 497], strides = [1, 1]} : vector<32x512xf32> to vector<32x497xf32>
    %143 = vector.extract_strided_slice %87 {offsets = [0, 0], sizes = [32, 15], strides = [1, 1]} : vector<32x512xf32> to vector<32x15xf32>
    %144 = tpu.concatenate %142, %143 in 1 : vector<32x497xf32>, vector<32x15xf32> -> vector<32x512xf32>
    %145 = vector.extract_strided_slice %3 {offsets = [5, 0], sizes = [1, 512], strides = [1, 1]} : vector<8x512xf32> to vector<1x512xf32>
    %146 = vector.broadcast %145 : vector<1x512xf32> to vector<32x512xf32>
    %147 = arith.mulf %144, %146 : vector<32x512xf32>
    %148 = vector.extract_strided_slice %88 {offsets = [0, 6], sizes = [32, 1], strides = [1, 1]} : vector<32x9xf32> to vector<32x1xf32>
    %149 = vector.broadcast %148 : vector<32x1xf32> to vector<32x512xf32>
    %150 = arith.mulf %147, %149 : vector<32x512xf32>
    %151 = arith.addf %141, %150 : vector<32x512xf32>
    %152 = vector.extract_strided_slice %87 {offsets = [0, 16], sizes = [32, 496], strides = [1, 1]} : vector<32x512xf32> to vector<32x496xf32>
    %153 = vector.extract_strided_slice %87 {offsets = [0, 0], sizes = [32, 16], strides = [1, 1]} : vector<32x512xf32> to vector<32x16xf32>
    %154 = tpu.concatenate %152, %153 in 1 : vector<32x496xf32>, vector<32x16xf32> -> vector<32x512xf32>
    %155 = vector.extract_strided_slice %3 {offsets = [6, 0], sizes = [1, 512], strides = [1, 1]} : vector<8x512xf32> to vector<1x512xf32>
    %156 = vector.broadcast %155 : vector<1x512xf32> to vector<32x512xf32>
    %157 = arith.mulf %154, %156 : vector<32x512xf32>
    %158 = vector.extract_strided_slice %88 {offsets = [0, 7], sizes = [32, 1], strides = [1, 1]} : vector<32x9xf32> to vector<32x1xf32>
    %159 = vector.broadcast %158 : vector<32x1xf32> to vector<32x512xf32>
    %160 = arith.mulf %157, %159 : vector<32x512xf32>
    %161 = arith.addf %151, %160 : vector<32x512xf32>
    %162 = vector.extract_strided_slice %87 {offsets = [0, 17], sizes = [32, 495], strides = [1, 1]} : vector<32x512xf32> to vector<32x495xf32>
    %163 = vector.extract_strided_slice %87 {offsets = [0, 0], sizes = [32, 17], strides = [1, 1]} : vector<32x512xf32> to vector<32x17xf32>
    %164 = tpu.concatenate %162, %163 in 1 : vector<32x495xf32>, vector<32x17xf32> -> vector<32x512xf32>
    %165 = vector.extract_strided_slice %3 {offsets = [7, 0], sizes = [1, 512], strides = [1, 1]} : vector<8x512xf32> to vector<1x512xf32>
    %166 = vector.broadcast %165 : vector<1x512xf32> to vector<32x512xf32>
    %167 = arith.mulf %164, %166 : vector<32x512xf32>
    %168 = vector.extract_strided_slice %88 {offsets = [0, 8], sizes = [32, 1], strides = [1, 1]} : vector<32x9xf32> to vector<32x1xf32>
    %169 = vector.broadcast %168 : vector<32x1xf32> to vector<32x512xf32>
    %170 = arith.mulf %167, %169 : vector<32x512xf32>
    %171 = arith.addf %161, %170 : vector<32x512xf32>
    %172 = math.tanh %171 : vector<32x512xf32>
    %173 = arith.addf %172, %87 : vector<32x512xf32>
    %174 = vector.extract_strided_slice %173 {offsets = [0, 0], sizes = [16, 512], strides = [1, 1]} : vector<32x512xf32> to vector<16x512xf32>
    %175 = vector.extract_strided_slice %173 {offsets = [16, 0], sizes = [16, 512], strides = [1, 1]} : vector<32x512xf32> to vector<16x512xf32>
    %176 = arith.mulf %174, %175 : vector<16x512xf32>
    %c0_9 = arith.constant 0 : index
    %c0_10 = arith.constant 0 : index
    %177 = vector.load %arg6[%c0_9, %c0_10] : memref<4x16xf32, #tpu.memory_space<vmem>>, vector<4x16xf32>
    %cst_11 = arith.constant dense<0.000000e+00> : vector<4x512xf32>
    %178 = tpu.matmul %177, %176, %cst_11 {dimension_numbers = #tpu.dot_dimension_numbers<[1], [0], [0], [1], [0, 0, 1, 1], [], []>} : vector<4x16xf32>, vector<16x512xf32>, vector<4x512xf32> -> vector<4x512xf32>
    %c0_12 = arith.constant 0 : index
    %c0_13 = arith.constant 0 : index
    %179 = vector.load %arg7[%c0_12, %c0_13] : memref<4x512xf32, #tpu.memory_space<vmem>>, vector<4x512xf32>
    tpu.vector_store %arg7[%c0_12, %c0_13], %178 {strides = array<i32>} : memref<4x512xf32, #tpu.memory_space<vmem>>, vector<4x512xf32>,
    return
  }
  func.func @transform_0(%arg0: i32) -> (i32, i32) {
    %c0_i32 = arith.constant 0 : i32
    %c0_i32_0 = arith.constant 0 : i32
    return %c0_i32, %arg0 : i32, i32
  }
  func.func @transform_1(%arg0: i32) -> (i32, i32) {
    %c0_i32 = arith.constant 0 : i32
    %c0_i32_0 = arith.constant 0 : i32
    return %c0_i32, %arg0 : i32, i32
  }
  func.func @transform_2(%arg0: i32) -> (i32, i32) {
    %c0_i32 = arith.constant 0 : i32
    %c0_i32_0 = arith.constant 0 : i32
    %c0_i32_1 = arith.constant 0 : i32
    return %c0_i32, %c0_i32_0 : i32, i32
  }
  func.func @transform_3(%arg0: i32) -> (i32, i32) {
    %c0_i32 = arith.constant 0 : i32
    %c0_i32_0 = arith.constant 0 : i32
    %c0_i32_1 = arith.constant 0 : i32
    return %c0_i32, %c0_i32_0 : i32, i32
  }
  func.func @transform_4(%arg0: i32) -> (i32, i32) {
    %c0_i32 = arith.constant 0 : i32
    %c0_i32_0 = arith.constant 0 : i32
    %c0_i32_1 = arith.constant 0 : i32
    return %c0_i32, %c0_i32_0 : i32, i32
  }
  func.func @transform_5(%arg0: i32) -> (i32, i32) {
    %c0_i32 = arith.constant 0 : i32
    %c0_i32_0 = arith.constant 0 : i32
    %c0_i32_1 = arith.constant 0 : i32
    return %c0_i32, %c0_i32_0 : i32, i32
  }
  func.func @transform_6(%arg0: i32) -> (i32, i32) {
    %c0_i32 = arith.constant 0 : i32
    %c0_i32_0 = arith.constant 0 : i32
    return %c0_i32, %arg0 : i32, i32
  }
}

</mosaic_0001>

<llo_original>
// kernel: iel_forward.1
$region0: #{iel_forward.1}
  #allocation0 [shape = 'u32[]', space=smem, size = 0x4, offset = 0x4, fixed_abs, tag = 'smem constant byte address 0x4 - core index']
  #allocation1 [shape = 'u32[144,128]{1,0:T(1,128)}', space=vmem, size = 0x12000, scoped, tag = 'internal scratch']
  %s0 = inlined_call_operand.vmem [shape: f32[8,512], index: 0, kind: input, shape index: {}]
  %s1 = inlined_call_operand.vmem [shape: f32[4,512], index: 1, kind: input, shape index: {}]
  %s2 = inlined_call_operand.vmem [shape: f32[32,4], index: 2, kind: input, shape index: {}]
  %s3 = inlined_call_operand.vmem [shape: f32[32,9], index: 3, kind: input, shape index: {}]
  %s4 = inlined_call_operand.vmem [shape: f32[32,9], index: 4, kind: input, shape index: {}]
  %s5 = inlined_call_operand.vmem [shape: f32[4,16], index: 5, kind: input, shape index: {}]
  %s6 = inlined_call_operand.vmem [shape: f32[4,512], index: 6, kind: output, shape index: {}]
  %s7 = sld [smem:[#allocation0]]
  $region34: #{iel_forward.1} parent=0
    _
  %s9 = ssub.s32 1, %s7
  %s10 = scalar_select 0, %s9, %s7
  // Predicated region
  $region2: #{iel_forward.1} parent=0 // pred_check
    _
  $region3: #{iel_forward.1} parent=0 // pred_check_branch
    %12 = sbr.rel (0) target = $region5
  $region4: #{iel_forward.1} parent=0 // pred_region
    _
  $region5: #{iel_forward.1} parent=0 // pred_fallthru
    _
  // Predicated region
  $region6: #{iel_forward.1} parent=0 // pred_check
    _
  $region7: #{iel_forward.1} parent=0 // pred_check_branch
    %14 = sbr.rel (0) target = $region9
  $region8: #{iel_forward.1} parent=0 // pred_region
    _
  $region9: #{iel_forward.1} parent=0 // pred_fallthru
    _
  // Predicated region
  $region10: #{iel_forward.1} parent=0 // pred_check
    _
  $region11: #{iel_forward.1} parent=0 // pred_check_branch
    %16 = sbr.rel (0) target = $region13
  $region12: #{iel_forward.1} parent=0 // pred_region
    _
  $region13: #{iel_forward.1} parent=0 // pred_fallthru
    _
  // Predicated region
  $region14: #{iel_forward.1} parent=0 // pred_check
    _
  $region15: #{iel_forward.1} parent=0 // pred_check_branch
    %18 = sbr.rel (0) target = $region17
  $region16: #{iel_forward.1} parent=0 // pred_region
    _
  $region17: #{iel_forward.1} parent=0 // pred_fallthru
    _
  // Predicated region
  $region18: #{iel_forward.1} parent=0 // pred_check
    _
  $region19: #{iel_forward.1} parent=0 // pred_check_branch
    %20 = sbr.rel (0) target = $region21
  $region20: #{iel_forward.1} parent=0 // pred_region
    _
  $region21: #{iel_forward.1} parent=0 // pred_fallthru
    _
  // Predicated region
  $region22: #{iel_forward.1} parent=0 // pred_check
    _
  $region23: #{iel_forward.1} parent=0 // pred_check_branch
    %22 = sbr.rel (0) target = $region25
  $region24: #{iel_forward.1} parent=0 // pred_region
    _
  $region25: #{iel_forward.1} parent=0 // pred_fallthru
    _
  %v23 = vld [vmem:[%s1] sm:$0xff]
  %v24 = vld [vmem:[%s1 + $0x8] sm:$0xff]
  %v25 = vld [vmem:[%s2] sm:$0xff]
  %v26 = vld [vmem:[%s2 + $0x8] sm:$0xff]
  %v27 = vld [vmem:[%s2 + $0x10] sm:$0xff]
  %v28 = vld [vmem:[%s2 + $0x18] sm:$0xff]
  %v31 = vcombine.high %v23, %v23
  %v32 = vcombine.high %v24, %v24
  %vm33 = vcmask 31744
  %v35 = vsel %vm33, %v25, 0
  %v38 = vsel %vm33, %v26, 0
  %v41 = vsel %vm33, %v27, 0
  %v44 = vsel %vm33, %v28, 0
  %vm46 = vcmask 1043456
  %v47 = vsel %vm46, %v23, 0
  %v49 = vsel %vm46, %v31, 0
  %v51 = vsel %vm46, %v24, 0
  %v53 = vsel %vm46, %v32, 0
  %55 = vmatprep.subr.mxu0 %v49
  %56 = vmatpush1.msra.mxu0 %v47
  %57 = vmatprep.subr.mxu0 0.0
  %58 = vmatpush1.msra.mxu0 0.0
  %59 = vmatprep.subr.mxu0 0.0
  %60 = vmatpush1.msra.mxu0 0.0
  %61 = vmatprep.subr.mxu0 0.0
  %62 = vmatpush1.msra.mxu0 0.0
  %63 = vmatprep.subr.mxu0 0.0
  %64 = vmatpush1.msra.mxu0 0.0
  %65 = vmatprep.subr.mxu0 0.0
  %66 = vmatpush1.msra.mxu0 0.0
  %67 = vmatprep.subr.mxu0 0.0
  %68 = vmatpush1.msra.mxu0 0.0
  %69 = vmatprep.subr.mxu0 0.0
  %70 = vmatpush1.msra.mxu0 0.0
  %71 = vmatprep.subr.mxu0 0.0
  %72 = vmatpush1.msra.mxu0 0.0
  %73 = vmatprep.subr.mxu0 0.0
  %74 = vmatpush1.msra.mxu0 0.0
  %75 = vmatprep.subr.mxu0 0.0
  %76 = vmatpush1.msra.mxu0 0.0
  %77 = vmatprep.subr.mxu0 0.0
  %78 = vmatpush1.msra.mxu0 0.0
  %79 = vmatprep.subr.mxu0 0.0
  %80 = vmatpush1.msra.mxu0 0.0
  %81 = vmatprep.subr.mxu0 0.0
  %82 = vmatpush1.msra.mxu0 0.0
  %83 = vmatprep.subr.mxu0 0.0
  %84 = vmatpush1.msra.mxu0 0.0
  %85 = vmatprep.subr.mxu0 0.0
  %86 = vmatpush1.msra.mxu0 0.0
  %87 = vmatprep.subr.mxu0 0.0
  %88 = vmatpush1.msra.mxu0 0.0
  %89 = vmatprep.subr.mxu0 0.0
  %90 = vmatpush1.msra.mxu0 0.0
  %91 = vmatprep.subr.mxu0 0.0
  %92 = vmatpush1.msra.mxu0 0.0
  %93 = vmatprep.subr.mxu0 0.0
  %94 = vmatpush1.msra.mxu0 0.0
  %95 = vmatprep.subr.mxu0 0.0
  %96 = vmatpush1.msra.mxu0 0.0
  %97 = vmatprep.subr.mxu0 0.0
  %98 = vmatpush1.msra.mxu0 0.0
  %99 = vmatprep.subr.mxu0 0.0
  %100 = vmatpush1.msra.mxu0 0.0
  %101 = vmatprep.subr.mxu0 0.0
  %102 = vmatpush1.msra.mxu0 0.0
  %103 = vmatprep.subr.mxu0 0.0
  %104 = vmatpush1.msra.mxu0 0.0
  %105 = vmatprep.subr.mxu0 0.0
  %106 = vmatpush1.msra.mxu0 0.0
  %107 = vmatprep.subr.mxu0 0.0
  %108 = vmatpush1.msra.mxu0 0.0
  %109 = vmatprep.subr.mxu0 0.0
  %110 = vmatpush1.msra.mxu0 0.0
  %111 = vmatprep.subr.mxu0 0.0
  %112 = vmatpush1.msra.mxu0 0.0
  %113 = vmatprep.subr.mxu0 0.0
  %114 = vmatpush1.msra.mxu0 0.0
  %115 = vmatprep.subr.mxu0 0.0
  %116 = vmatpush1.msra.mxu0 0.0
  %117 = vmatprep.subr.mxu0 0.0
  %118 = vmatpush1.msra.mxu0 0.0
  %119 = vmatprep.mubr.f32.mxu0 0.0
  %120 = vmatmul.mubr.f32.gmra.mrb[0].mxu0 %v35
  %v121 = vpop.f32.mrb[0].mxu0
  %v122 = vadd.f32 0.0, %v121
  %v123 = vpop.f32.mrb[0].mxu0
  %v124 = vadd.f32 0.0, %v123
  %125 = vmatprep.mubr.f32.mxu0 0.0
  %126 = vmatmul.mubr.f32.gmra.mrb[0].mxu0 %v38
  %v127 = vpop.f32.mrb[0].mxu0
  %v128 = vadd.f32 0.0, %v127
  %v129 = vpop.f32.mrb[0].mxu0
  %v130 = vadd.f32 0.0, %v129
  %131 = vmatprep.mubr.f32.mxu0 0.0
  %132 = vmatmul.mubr.f32.gmra.mrb[0].mxu0 %v41
  %v133 = vpop.f32.mrb[0].mxu0
  %v134 = vadd.f32 0.0, %v133
  %v135 = vpop.f32.mrb[0].mxu0
  %v136 = vadd.f32 0.0, %v135
  %137 = vmatprep.mubr.f32.mxu0 0.0
  %138 = vmatmul.mubr.f32.gmra.mrb[0].mxu0 %v44
  %v139 = vpop.f32.mrb[0].mxu0
  %v140 = vadd.f32 0.0, %v139
  %v141 = vpop.f32.mrb[0].mxu0
  %v142 = vadd.f32 0.0, %v141
  %143 = vdwg.mxu0
  %144 = vmatprep.subr.mxu0 %v53
  %145 = vmatpush1.msra.mxu0 %v51
  %146 = vmatprep.subr.mxu0 0.0
  %147 = vmatpush1.msra.mxu0 0.0
  %148 = vmatprep.subr.mxu0 0.0
  %149 = vmatpush1.msra.mxu0 0.0
  %150 = vmatprep.subr.mxu0 0.0
  %151 = vmatpush1.msra.mxu0 0.0
  %152 = vmatprep.subr.mxu0 0.0
  %153 = vmatpush1.msra.mxu0 0.0
  %154 = vmatprep.subr.mxu0 0.0
  %155 = vmatpush1.msra.mxu0 0.0
  %156 = vmatprep.subr.mxu0 0.0
  %157 = vmatpush1.msra.mxu0 0.0
  %158 = vmatprep.subr.mxu0 0.0
  %159 = vmatpush1.msra.mxu0 0.0
  %160 = vmatprep.subr.mxu0 0.0
  %161 = vmatpush1.msra.mxu0 0.0
  %162 = vmatprep.subr.mxu0 0.0
  %163 = vmatpush1.msra.mxu0 0.0
  %164 = vmatprep.subr.mxu0 0.0
  %165 = vmatpush1.msra.mxu0 0.0
  %166 = vmatprep.subr.mxu0 0.0
  %167 = vmatpush1.msra.mxu0 0.0
  %168 = vmatprep.subr.mxu0 0.0
  %169 = vmatpush1.msra.mxu0 0.0
  %170 = vmatprep.subr.mxu0 0.0
  %171 = vmatpush1.msra.mxu0 0.0
  %172 = vmatprep.subr.mxu0 0.0
  %173 = vmatpush1.msra.mxu0 0.0
  %174 = vmatprep.subr.mxu0 0.0
  %175 = vmatpush1.msra.mxu0 0.0
  %176 = vmatprep.subr.mxu0 0.0
  %177 = vmatpush1.msra.mxu0 0.0
  %178 = vmatprep.subr.mxu0 0.0
  %179 = vmatpush1.msra.mxu0 0.0
  %180 = vmatprep.subr.mxu0 0.0
  %181 = vmatpush1.msra.mxu0 0.0
  %182 = vmatprep.subr.mxu0 0.0
  %183 = vmatpush1.msra.mxu0 0.0
  %184 = vmatprep.subr.mxu0 0.0
  %185 = vmatpush1.msra.mxu0 0.0
  %186 = vmatprep.subr.mxu0 0.0
  %187 = vmatpush1.msra.mxu0 0.0
  %188 = vmatprep.subr.mxu0 0.0
  %189 = vmatpush1.msra.mxu0 0.0
  %190 = vmatprep.subr.mxu0 0.0
  %191 = vmatpush1.msra.mxu0 0.0
  %192 = vmatprep.subr.mxu0 0.0
  %193 = vmatpush1.msra.mxu0 0.0
  %194 = vmatprep.subr.mxu0 0.0
  %195 = vmatpush1.msra.mxu0 0.0
  %196 = vmatprep.subr.mxu0 0.0
  %197 = vmatpush1.msra.mxu0 0.0
  %198 = vmatprep.subr.mxu0 0.0
  %199 = vmatpush1.msra.mxu0 0.0
  %200 = vmatprep.subr.mxu0 0.0
  %201 = vmatpush1.msra.mxu0 0.0
  %202 = vmatprep.subr.mxu0 0.0
  %203 = vmatpush1.msra.mxu0 0.0
  %204 = vmatprep.subr.mxu0 0.0
  %205 = vmatpush1.msra.mxu0 0.0
  %206 = vmatprep.subr.mxu0 0.0
  %207 = vmatpush1.msra.mxu0 0.0
  %208 = vmatprep.mubr.f32.mxu0 0.0
  %209 = vmatmul.mubr.f32.gmra.mrb[0].mxu0 %v35
  %v210 = vpop.f32.mrb[0].mxu0
  %v211 = vadd.f32 0.0, %v210
  %v212 = vpop.f32.mrb[0].mxu0
  %v213 = vadd.f32 0.0, %v212
  %214 = vmatprep.mubr.f32.mxu0 0.0
  %215 = vmatmul.mubr.f32.gmra.mrb[0].mxu0 %v38
  %v216 = vpop.f32.mrb[0].mxu0
  %v217 = vadd.f32 0.0, %v216
  %v218 = vpop.f32.mrb[0].mxu0
  %v219 = vadd.f32 0.0, %v218
  %220 = vmatprep.mubr.f32.mxu0 0.0
  %221 = vmatmul.mubr.f32.gmra.mrb[0].mxu0 %v41
  %v222 = vpop.f32.mrb[0].mxu0
  %v223 = vadd.f32 0.0, %v222
  %v224 = vpop.f32.mrb[0].mxu0
  %v225 = vadd.f32 0.0, %v224
  %226 = vmatprep.mubr.f32.mxu0 0.0
  %227 = vmatmul.mubr.f32.gmra.mrb[0].mxu0 %v44
  %v228 = vpop.f32.mrb[0].mxu0
  %v229 = vadd.f32 0.0, %v228
  %v230 = vpop.f32.mrb[0].mxu0
  %v231 = vadd.f32 0.0, %v230
  %232 = vdwg.mxu0
  %v233 = vld [vmem:[%s0] sm:$0xff]
  %v234 = vld [vmem:[%s0 + $0x8] sm:$0xff]
  %v235 = vld [vmem:[%s0 + $0x10] sm:$0xff]
  %v236 = vld [vmem:[%s0 + $0x18] sm:$0xff]
  %v237 = vld [vmem:[%s3] sm:$0xff]
  %v238 = vld [vmem:[%s3 + $0x8] sm:$0xff]
  %v239 = vld [vmem:[%s3 + $0x10] sm:$0xff]
  %v240 = vld [vmem:[%s3 + $0x18] sm:$0xff]
  %242 = vset.pattern.permute.xlu0 4
  %243 = vperm.xlu0 %242, %v237
  %v244 = vpop.permute.xlu0 %243
  %247 = vset.pattern.permute.xlu0 4
  %248 = vperm.xlu0 %247, %v238
  %v249 = vpop.permute.xlu0 %248
  %252 = vset.pattern.permute.xlu0 4
  %253 = vperm.xlu0 %252, %v239
  %v254 = vpop.permute.xlu0 %253
  %257 = vset.pattern.permute.xlu0 4
  %258 = vperm.xlu0 %257, %v240
  %v259 = vpop.permute.xlu0 %258
  %v261 = vmul.f32 %v122, %v244
  %v262 = vmul.f32 %v124, %v244
  %v263 = vmul.f32 %v211, %v244
  %v264 = vmul.f32 %v213, %v244
  %v265 = vmul.f32 %v128, %v249
  %v266 = vmul.f32 %v130, %v249
  %v267 = vmul.f32 %v217, %v249
  %v268 = vmul.f32 %v219, %v249
  %v269 = vmul.f32 %v134, %v254
  %v270 = vmul.f32 %v136, %v254
  %v271 = vmul.f32 %v223, %v254
  %v272 = vmul.f32 %v225, %v254
  %v273 = vmul.f32 %v140, %v259
  %v274 = vmul.f32 %v142, %v259
  %v275 = vmul.f32 %v229, %v259
  %v276 = vmul.f32 %v231, %v259
  %281 = vrot.lane.b32.xlu0 %v213, 17
  %v282 = vpop.permute.xlu0 %281
  %283 = vrot.lane.b32.xlu0 %v219, 17
  %v284 = vpop.permute.xlu0 %283
  %285 = vrot.lane.b32.xlu0 %v225, 17
  %v286 = vpop.permute.xlu0 %285
  %287 = vrot.lane.b32.xlu0 %v231, 17
  %v288 = vpop.permute.xlu0 %287
  %305 = vrot.lane.b32.xlu0 %v122, 17
  %v306 = vpop.permute.xlu0 %305
  %307 = vrot.lane.b32.xlu0 %v124, 17
  %v308 = vpop.permute.xlu0 %307
  %309 = vrot.lane.b32.xlu0 %v211, 17
  %v310 = vpop.permute.xlu0 %309
  %311 = vrot.lane.b32.xlu0 %v128, 17
  %v312 = vpop.permute.xlu0 %311
  %313 = vrot.lane.b32.xlu0 %v130, 17
  %v314 = vpop.permute.xlu0 %313
  %315 = vrot.lane.b32.xlu0 %v217, 17
  %v316 = vpop.permute.xlu0 %315
  %317 = vrot.lane.b32.xlu0 %v134, 17
  %v318 = vpop.permute.xlu0 %317
  %319 = vrot.lane.b32.xlu0 %v136, 17
  %v320 = vpop.permute.xlu0 %319
  %321 = vrot.lane.b32.xlu0 %v223, 17
  %v322 = vpop.permute.xlu0 %321
  %323 = vrot.lane.b32.xlu0 %v140, 17
  %v324 = vpop.permute.xlu0 %323
  %325 = vrot.lane.b32.xlu0 %v142, 17
  %v326 = vpop.permute.xlu0 %325
  %327 = vrot.lane.b32.xlu0 %v229, 17
  %v328 = vpop.permute.xlu0 %327
  %vm329 = vcmask 138240
  %v330 = vsel %vm329, %v306, %v308
  %v331 = vsel %vm329, %v308, %v310
  %v332 = vsel %vm329, %v310, %v282
  %v333 = vsel %vm329, %v312, %v314
  %v334 = vsel %vm329, %v314, %v316
  %v335 = vsel %vm329, %v316, %v284
  %v336 = vsel %vm329, %v318, %v320
  %v337 = vsel %vm329, %v320, %v322
  %v338 = vsel %vm329, %v322, %v286
  %v339 = vsel %vm329, %v324, %v326
  %v340 = vsel %vm329, %v326, %v328
  %v341 = vsel %vm329, %v328, %v288
  %v358 = vsel %vm329, %v282, %v306
  %v359 = vsel %vm329, %v284, %v312
  %v360 = vsel %vm329, %v286, %v318
  %v361 = vsel %vm329, %v288, %v324
  %v362 = vlaneseq
  %v363 = vshrl.u32 %v362, 7
  %v364 = vsub.s32 0, %v363
  %v365 = vrot.slane %v233, %v364
  %v366 = vlaneseq
  %v367 = vshrl.u32 %v366, 7
  %v368 = vsub.s32 0, %v367
  %v369 = vrot.slane %v234, %v368
  %v370 = vlaneseq
  %v371 = vshrl.u32 %v370, 7
  %v372 = vsub.s32 0, %v371
  %v373 = vrot.slane %v235, %v372
  %v374 = vlaneseq
  %v375 = vshrl.u32 %v374, 7
  %v376 = vsub.s32 0, %v375
  %v377 = vrot.slane %v236, %v376
  %v378 = vmul.f32 %v358, %v365
  %v379 = vmul.f32 %v330, %v369
  %v380 = vmul.f32 %v331, %v373
  %v381 = vmul.f32 %v332, %v377
  %v382 = vmul.f32 %v359, %v365
  %v383 = vmul.f32 %v333, %v369
  %v384 = vmul.f32 %v334, %v373
  %v385 = vmul.f32 %v335, %v377
  %v386 = vmul.f32 %v360, %v365
  %v387 = vmul.f32 %v336, %v369
  %v388 = vmul.f32 %v337, %v373
  %v389 = vmul.f32 %v338, %v377
  %v390 = vmul.f32 %v361, %v365
  %v391 = vmul.f32 %v339, %v369
  %v392 = vmul.f32 %v340, %v373
  %v393 = vmul.f32 %v341, %v377
  %394 = vset.pattern.permute.xlu0 0
  %395 = vperm.xlu0 %394, %v237
  %v396 = vpop.permute.xlu0 %395
  %398 = vset.pattern.permute.xlu0 0
  %399 = vperm.xlu0 %398, %v238
  %v400 = vpop.permute.xlu0 %399
  %402 = vset.pattern.permute.xlu0 0
  %403 = vperm.xlu0 %402, %v239
  %v404 = vpop.permute.xlu0 %403
  %406 = vset.pattern.permute.xlu0 0
  %407 = vperm.xlu0 %406, %v240
  %v408 = vpop.permute.xlu0 %407
  %v410 = vmul.f32 %v378, %v396
  %v411 = vmul.f32 %v379, %v396
  %v412 = vmul.f32 %v380, %v396
  %v413 = vmul.f32 %v381, %v396
  %v414 = vmul.f32 %v382, %v400
  %v415 = vmul.f32 %v383, %v400
  %v416 = vmul.f32 %v384, %v400
  %v417 = vmul.f32 %v385, %v400
  %v418 = vmul.f32 %v386, %v404
  %v419 = vmul.f32 %v387, %v404
  %v420 = vmul.f32 %v388, %v404
  %v421 = vmul.f32 %v389, %v404
  %v422 = vmul.f32 %v390, %v408
  %v423 = vmul.f32 %v391, %v408
  %v424 = vmul.f32 %v392, %v408
  %v425 = vmul.f32 %v393, %v408
  %v426 = vadd.f32 %v261, %v410
  %v427 = vadd.f32 %v262, %v411
  %v428 = vadd.f32 %v263, %v412
  %v429 = vadd.f32 %v264, %v413
  %v430 = vadd.f32 %v265, %v414
  %v431 = vadd.f32 %v266, %v415
  %v432 = vadd.f32 %v267, %v416
  %v433 = vadd.f32 %v268, %v417
  %v434 = vadd.f32 %v269, %v418
  %v435 = vadd.f32 %v270, %v419
  %v436 = vadd.f32 %v271, %v420
  %v437 = vadd.f32 %v272, %v421
  %v438 = vadd.f32 %v273, %v422
  %v439 = vadd.f32 %v274, %v423
  %v440 = vadd.f32 %v275, %v424
  %v441 = vadd.f32 %v276, %v425
  %442 = vrot.lane.b32.xlu0 %v213, 16
  %v443 = vpop.permute.xlu0 %442
  %444 = vrot.lane.b32.xlu0 %v219, 16
  %v445 = vpop.permute.xlu0 %444
  %446 = vrot.lane.b32.xlu0 %v225, 16
  %v447 = vpop.permute.xlu0 %446
  %448 = vrot.lane.b32.xlu0 %v231, 16
  %v449 = vpop.permute.xlu0 %448
  %454 = vrot.lane.b32.xlu0 %v122, 16
  %v455 = vpop.permute.xlu0 %454
  %456 = vrot.lane.b32.xlu0 %v124, 16
  %v457 = vpop.permute.xlu0 %456
  %458 = vrot.lane.b32.xlu0 %v211, 16
  %v459 = vpop.permute.xlu0 %458
  %460 = vrot.lane.b32.xlu0 %v128, 16
  %v461 = vpop.permute.xlu0 %460
  %462 = vrot.lane.b32.xlu0 %v130, 16
  %v463 = vpop.permute.xlu0 %462
  %464 = vrot.lane.b32.xlu0 %v217, 16
  %v465 = vpop.permute.xlu0 %464
  %466 = vrot.lane.b32.xlu0 %v134, 16
  %v467 = vpop.permute.xlu0 %466
  %468 = vrot.lane.b32.xlu0 %v136, 16
  %v469 = vpop.permute.xlu0 %468
  %470 = vrot.lane.b32.xlu0 %v223, 16
  %v471 = vpop.permute.xlu0 %470
  %472 = vrot.lane.b32.xlu0 %v140, 16
  %v473 = vpop.permute.xlu0 %472
  %474 = vrot.lane.b32.xlu0 %v142, 16
  %v475 = vpop.permute.xlu0 %474
  %476 = vrot.lane.b32.xlu0 %v229, 16
  %v477 = vpop.permute.xlu0 %476
  %vm478 = vcmask 130048
  %v479 = vsel %vm478, %v455, %v457
  %v480 = vsel %vm478, %v457, %v459
  %v481 = vsel %vm478, %v459, %v443
  %v482 = vsel %vm478, %v461, %v463
  %v483 = vsel %vm478, %v463, %v465
  %v484 = vsel %vm478, %v465, %v445
  %v485 = vsel %vm478, %v467, %v469
  %v486 = vsel %vm478, %v469, %v471
  %v487 = vsel %vm478, %v471, %v447
  %v488 = vsel %vm478, %v473, %v475
  %v489 = vsel %vm478, %v475, %v477
  %v490 = vsel %vm478, %v477, %v449
  %v507 = vsel %vm478, %v443, %v455
  %v508 = vsel %vm478, %v445, %v461
  %v509 = vsel %vm478, %v447, %v467
  %v510 = vsel %vm478, %v449, %v473
  %v511 = vlaneseq
  %v512 = vshrl.u32 %v511, 7
  %v513 = vsub.s32 1, %v512
  %v514 = vrot.slane %v233, %v513
  %v515 = vlaneseq
  %v516 = vshrl.u32 %v515, 7
  %v517 = vsub.s32 1, %v516
  %v518 = vrot.slane %v234, %v517
  %v519 = vlaneseq
  %v520 = vshrl.u32 %v519, 7
  %v521 = vsub.s32 1, %v520
  %v522 = vrot.slane %v235, %v521
  %v523 = vlaneseq
  %v524 = vshrl.u32 %v523, 7
  %v525 = vsub.s32 1, %v524
  %v526 = vrot.slane %v236, %v525
  %v527 = vmul.f32 %v507, %v514
  %v528 = vmul.f32 %v479, %v518
  %v529 = vmul.f32 %v480, %v522
  %v530 = vmul.f32 %v481, %v526
  %v531 = vmul.f32 %v508, %v514
  %v532 = vmul.f32 %v482, %v518
  %v533 = vmul.f32 %v483, %v522
  %v534 = vmul.f32 %v484, %v526
  %v535 = vmul.f32 %v509, %v514
  %v536 = vmul.f32 %v485, %v518
  %v537 = vmul.f32 %v486, %v522
  %v538 = vmul.f32 %v487, %v526
  %v539 = vmul.f32 %v510, %v514
  %v540 = vmul.f32 %v488, %v518
  %v541 = vmul.f32 %v489, %v522
  %v542 = vmul.f32 %v490, %v526
  %543 = vset.pattern.permute.xlu0 1
  %544 = vperm.xlu0 %543, %v237
  %v545 = vpop.permute.xlu0 %544
  %547 = vset.pattern.permute.xlu0 1
  %548 = vperm.xlu0 %547, %v238
  %v549 = vpop.permute.xlu0 %548
  %551 = vset.pattern.permute.xlu0 1
  %552 = vperm.xlu0 %551, %v239
  %v553 = vpop.permute.xlu0 %552
  %555 = vset.pattern.permute.xlu0 1
  %556 = vperm.xlu0 %555, %v240
  %v557 = vpop.permute.xlu0 %556
  %v559 = vmul.f32 %v527, %v545
  %v560 = vmul.f32 %v528, %v545
  %v561 = vmul.f32 %v529, %v545
  %v562 = vmul.f32 %v530, %v545
  %v563 = vmul.f32 %v531, %v549
  %v564 = vmul.f32 %v532, %v549
  %v565 = vmul.f32 %v533, %v549
  %v566 = vmul.f32 %v534, %v549
  %v567 = vmul.f32 %v535, %v553
  %v568 = vmul.f32 %v536, %v553
  %v569 = vmul.f32 %v537, %v553
  %v570 = vmul.f32 %v538, %v553
  %v571 = vmul.f32 %v539, %v557
  %v572 = vmul.f32 %v540, %v557
  %v573 = vmul.f32 %v541, %v557
  %v574 = vmul.f32 %v542, %v557
  %v575 = vadd.f32 %v426, %v559
  %v576 = vadd.f32 %v427, %v560
  %v577 = vadd.f32 %v428, %v561
  %v578 = vadd.f32 %v429, %v562
  %v579 = vadd.f32 %v430, %v563
  %v580 = vadd.f32 %v431, %v564
  %v581 = vadd.f32 %v432, %v565
  %v582 = vadd.f32 %v433, %v566
  %v583 = vadd.f32 %v434, %v567
  %v584 = vadd.f32 %v435, %v568
  %v585 = vadd.f32 %v436, %v569
  %v586 = vadd.f32 %v437, %v570
  %v587 = vadd.f32 %v438, %v571
  %v588 = vadd.f32 %v439, %v572
  %v589 = vadd.f32 %v440, %v573
  %v590 = vadd.f32 %v441, %v574
  %591 = vrot.lane.b32.xlu0 %v213, 15
  %v592 = vpop.permute.xlu0 %591
  %593 = vrot.lane.b32.xlu0 %v219, 15
  %v594 = vpop.permute.xlu0 %593
  %595 = vrot.lane.b32.xlu0 %v225, 15
  %v596 = vpop.permute.xlu0 %595
  %597 = vrot.lane.b32.xlu0 %v231, 15
  %v598 = vpop.permute.xlu0 %597
  %603 = vrot.lane.b32.xlu0 %v122, 15
  %v604 = vpop.permute.xlu0 %603
  %605 = vrot.lane.b32.xlu0 %v124, 15
  %v606 = vpop.permute.xlu0 %605
  %607 = vrot.lane.b32.xlu0 %v211, 15
  %v608 = vpop.permute.xlu0 %607
  %609 = vrot.lane.b32.xlu0 %v128, 15
  %v610 = vpop.permute.xlu0 %609
  %611 = vrot.lane.b32.xlu0 %v130, 15
  %v612 = vpop.permute.xlu0 %611
  %613 = vrot.lane.b32.xlu0 %v217, 15
  %v614 = vpop.permute.xlu0 %613
  %615 = vrot.lane.b32.xlu0 %v134, 15
  %v616 = vpop.permute.xlu0 %615
  %617 = vrot.lane.b32.xlu0 %v136, 15
  %v618 = vpop.permute.xlu0 %617
  %619 = vrot.lane.b32.xlu0 %v223, 15
  %v620 = vpop.permute.xlu0 %619
  %621 = vrot.lane.b32.xlu0 %v140, 15
  %v622 = vpop.permute.xlu0 %621
  %623 = vrot.lane.b32.xlu0 %v142, 15
  %v624 = vpop.permute.xlu0 %623
  %625 = vrot.lane.b32.xlu0 %v229, 15
  %v626 = vpop.permute.xlu0 %625
  %vm627 = vcmask 121856
  %v628 = vsel %vm627, %v604, %v606
  %v629 = vsel %vm627, %v606, %v608
  %v630 = vsel %vm627, %v608, %v592
  %v631 = vsel %vm627, %v610, %v612
  %v632 = vsel %vm627, %v612, %v614
  %v633 = vsel %vm627, %v614, %v594
  %v634 = vsel %vm627, %v616, %v618
  %v635 = vsel %vm627, %v618, %v620
  %v636 = vsel %vm627, %v620, %v596
  %v637 = vsel %vm627, %v622, %v624
  %v638 = vsel %vm627, %v624, %v626
  %v639 = vsel %vm627, %v626, %v598
  %v656 = vsel %vm627, %v592, %v604
  %v657 = vsel %vm627, %v594, %v610
  %v658 = vsel %vm627, %v596, %v616
  %v659 = vsel %vm627, %v598, %v622
  %v660 = vlaneseq
  %v661 = vshrl.u32 %v660, 7
  %v662 = vsub.s32 2, %v661
  %v663 = vrot.slane %v233, %v662
  %v664 = vlaneseq
  %v665 = vshrl.u32 %v664, 7
  %v666 = vsub.s32 2, %v665
  %v667 = vrot.slane %v234, %v666
  %v668 = vlaneseq
  %v669 = vshrl.u32 %v668, 7
  %v670 = vsub.s32 2, %v669
  %v671 = vrot.slane %v235, %v670
  %v672 = vlaneseq
  %v673 = vshrl.u32 %v672, 7
  %v674 = vsub.s32 2, %v673
  %v675 = vrot.slane %v236, %v674
  %v676 = vmul.f32 %v656, %v663
  %v677 = vmul.f32 %v628, %v667
  %v678 = vmul.f32 %v629, %v671
  %v679 = vmul.f32 %v630, %v675
  %v680 = vmul.f32 %v657, %v663
  %v681 = vmul.f32 %v631, %v667
  %v682 = vmul.f32 %v632, %v671
  %v683 = vmul.f32 %v633, %v675
  %v684 = vmul.f32 %v658, %v663
  %v685 = vmul.f32 %v634, %v667
  %v686 = vmul.f32 %v635, %v671
  %v687 = vmul.f32 %v636, %v675
  %v688 = vmul.f32 %v659, %v663
  %v689 = vmul.f32 %v637, %v667
  %v690 = vmul.f32 %v638, %v671
  %v691 = vmul.f32 %v639, %v675
  %692 = vset.pattern.permute.xlu0 2
  %693 = vperm.xlu0 %692, %v237
  %v694 = vpop.permute.xlu0 %693
  %696 = vset.pattern.permute.xlu0 2
  %697 = vperm.xlu0 %696, %v238
  %v698 = vpop.permute.xlu0 %697
  %700 = vset.pattern.permute.xlu0 2
  %701 = vperm.xlu0 %700, %v239
  %v702 = vpop.permute.xlu0 %701
  %704 = vset.pattern.permute.xlu0 2
  %705 = vperm.xlu0 %704, %v240
  %v706 = vpop.permute.xlu0 %705
  %v708 = vmul.f32 %v676, %v694
  %v709 = vmul.f32 %v677, %v694
  %v710 = vmul.f32 %v678, %v694
  %v711 = vmul.f32 %v679, %v694
  %v712 = vmul.f32 %v680, %v698
  %v713 = vmul.f32 %v681, %v698
  %v714 = vmul.f32 %v682, %v698
  %v715 = vmul.f32 %v683, %v698
  %v716 = vmul.f32 %v684, %v702
  %v717 = vmul.f32 %v685, %v702
  %v718 = vmul.f32 %v686, %v702
  %v719 = vmul.f32 %v687, %v702
  %v720 = vmul.f32 %v688, %v706
  %v721 = vmul.f32 %v689, %v706
  %v722 = vmul.f32 %v690, %v706
  %v723 = vmul.f32 %v691, %v706
  %v724 = vadd.f32 %v575, %v708
  %v725 = vadd.f32 %v576, %v709
  %v726 = vadd.f32 %v577, %v710
  %v727 = vadd.f32 %v578, %v711
  %v728 = vadd.f32 %v579, %v712
  %v729 = vadd.f32 %v580, %v713
  %v730 = vadd.f32 %v581, %v714
  %v731 = vadd.f32 %v582, %v715
  %v732 = vadd.f32 %v583, %v716
  %v733 = vadd.f32 %v584, %v717
  %v734 = vadd.f32 %v585, %v718
  %v735 = vadd.f32 %v586, %v719
  %v736 = vadd.f32 %v587, %v720
  %v737 = vadd.f32 %v588, %v721
  %v738 = vadd.f32 %v589, %v722
  %v739 = vadd.f32 %v590, %v723
  %740 = vrot.lane.b32.xlu0 %v213, 1
  %v741 = vpop.permute.xlu0 %740
  %742 = vrot.lane.b32.xlu0 %v219, 1
  %v743 = vpop.permute.xlu0 %742
  %744 = vrot.lane.b32.xlu0 %v225, 1
  %v745 = vpop.permute.xlu0 %744
  %746 = vrot.lane.b32.xlu0 %v231, 1
  %v747 = vpop.permute.xlu0 %746
  %752 = vrot.lane.b32.xlu0 %v122, 1
  %v753 = vpop.permute.xlu0 %752
  %754 = vrot.lane.b32.xlu0 %v124, 1
  %v755 = vpop.permute.xlu0 %754
  %756 = vrot.lane.b32.xlu0 %v211, 1
  %v757 = vpop.permute.xlu0 %756
  %758 = vrot.lane.b32.xlu0 %v128, 1
  %v759 = vpop.permute.xlu0 %758
  %760 = vrot.lane.b32.xlu0 %v130, 1
  %v761 = vpop.permute.xlu0 %760
  %762 = vrot.lane.b32.xlu0 %v217, 1
  %v763 = vpop.permute.xlu0 %762
  %764 = vrot.lane.b32.xlu0 %v134, 1
  %v765 = vpop.permute.xlu0 %764
  %766 = vrot.lane.b32.xlu0 %v136, 1
  %v767 = vpop.permute.xlu0 %766
  %768 = vrot.lane.b32.xlu0 %v223, 1
  %v769 = vpop.permute.xlu0 %768
  %770 = vrot.lane.b32.xlu0 %v140, 1
  %v771 = vpop.permute.xlu0 %770
  %772 = vrot.lane.b32.xlu0 %v142, 1
  %v773 = vpop.permute.xlu0 %772
  %774 = vrot.lane.b32.xlu0 %v229, 1
  %v775 = vpop.permute.xlu0 %774
  %vm776 = vcmask 7168
  %v777 = vsel %vm776, %v753, %v755
  %v778 = vsel %vm776, %v755, %v757
  %v779 = vsel %vm776, %v757, %v741
  %v780 = vsel %vm776, %v759, %v761
  %v781 = vsel %vm776, %v761, %v763
  %v782 = vsel %vm776, %v763, %v743
  %v783 = vsel %vm776, %v765, %v767
  %v784 = vsel %vm776, %v767, %v769
  %v785 = vsel %vm776, %v769, %v745
  %v786 = vsel %vm776, %v771, %v773
  %v787 = vsel %vm776, %v773, %v775
  %v788 = vsel %vm776, %v775, %v747
  %v805 = vsel %vm776, %v741, %v753
  %v806 = vsel %vm776, %v743, %v759
  %v807 = vsel %vm776, %v745, %v765
  %v808 = vsel %vm776, %v747, %v771
  %v809 = vlaneseq
  %v810 = vshrl.u32 %v809, 7
  %v811 = vsub.s32 3, %v810
  %v812 = vrot.slane %v233, %v811
  %v813 = vlaneseq
  %v814 = vshrl.u32 %v813, 7
  %v815 = vsub.s32 3, %v814
  %v816 = vrot.slane %v234, %v815
  %v817 = vlaneseq
  %v818 = vshrl.u32 %v817, 7
  %v819 = vsub.s32 3, %v818
  %v820 = vrot.slane %v235, %v819
  %v821 = vlaneseq
  %v822 = vshrl.u32 %v821, 7
  %v823 = vsub.s32 3, %v822
  %v824 = vrot.slane %v236, %v823
  %v825 = vmul.f32 %v805, %v812
  %v826 = vmul.f32 %v777, %v816
  %v827 = vmul.f32 %v778, %v820
  %v828 = vmul.f32 %v779, %v824
  %v829 = vmul.f32 %v806, %v812
  %v830 = vmul.f32 %v780, %v816
  %v831 = vmul.f32 %v781, %v820
  %v832 = vmul.f32 %v782, %v824
  %v833 = vmul.f32 %v807, %v812
  %v834 = vmul.f32 %v783, %v816
  %v835 = vmul.f32 %v784, %v820
  %v836 = vmul.f32 %v785, %v824
  %v837 = vmul.f32 %v808, %v812
  %v838 = vmul.f32 %v786, %v816
  %v839 = vmul.f32 %v787, %v820
  %v840 = vmul.f32 %v788, %v824
  %841 = vset.pattern.permute.xlu0 3
  %842 = vperm.xlu0 %841, %v237
  %v843 = vpop.permute.xlu0 %842
  %845 = vset.pattern.permute.xlu0 3
  %846 = vperm.xlu0 %845, %v238
  %v847 = vpop.permute.xlu0 %846
  %849 = vset.pattern.permute.xlu0 3
  %850 = vperm.xlu0 %849, %v239
  %v851 = vpop.permute.xlu0 %850
  %853 = vset.pattern.permute.xlu0 3
  %854 = vperm.xlu0 %853, %v240
  %v855 = vpop.permute.xlu0 %854
  %v857 = vmul.f32 %v825, %v843
  %v858 = vmul.f32 %v826, %v843
  %v859 = vmul.f32 %v827, %v843
  %v860 = vmul.f32 %v828, %v843
  %v861 = vmul.f32 %v829, %v847
  %v862 = vmul.f32 %v830, %v847
  %v863 = vmul.f32 %v831, %v847
  %v864 = vmul.f32 %v832, %v847
  %v865 = vmul.f32 %v833, %v851
  %v866 = vmul.f32 %v834, %v851
  %v867 = vmul.f32 %v835, %v851
  %v868 = vmul.f32 %v836, %v851
  %v869 = vmul.f32 %v837, %v855
  %v870 = vmul.f32 %v838, %v855
  %v871 = vmul.f32 %v839, %v855
  %v872 = vmul.f32 %v840, %v855
  %v873 = vadd.f32 %v724, %v857
  %v874 = vadd.f32 %v725, %v858
  %v875 = vadd.f32 %v726, %v859
  %v876 = vadd.f32 %v727, %v860
  %v877 = vadd.f32 %v728, %v861
  %v878 = vadd.f32 %v729, %v862
  %v879 = vadd.f32 %v730, %v863
  %v880 = vadd.f32 %v731, %v864
  %v881 = vadd.f32 %v732, %v865
  %v882 = vadd.f32 %v733, %v866
  %v883 = vadd.f32 %v734, %v867
  %v884 = vadd.f32 %v735, %v868
  %v885 = vadd.f32 %v736, %v869
  %v886 = vadd.f32 %v737, %v870
  %v887 = vadd.f32 %v738, %v871
  %v888 = vadd.f32 %v739, %v872
  %889 = vrot.lane.b32.xlu0 %v122, 127
  %v890 = vpop.permute.xlu0 %889
  %891 = vrot.lane.b32.xlu0 %v124, 127
  %v892 = vpop.permute.xlu0 %891
  %893 = vrot.lane.b32.xlu0 %v211, 127
  %v894 = vpop.permute.xlu0 %893
  %895 = vrot.lane.b32.xlu0 %v213, 127
  %v896 = vpop.permute.xlu0 %895
  %897 = vrot.lane.b32.xlu0 %v128, 127
  %v898 = vpop.permute.xlu0 %897
  %899 = vrot.lane.b32.xlu0 %v130, 127
  %v900 = vpop.permute.xlu0 %899
  %901 = vrot.lane.b32.xlu0 %v217, 127
  %v902 = vpop.permute.xlu0 %901
  %903 = vrot.lane.b32.xlu0 %v219, 127
  %v904 = vpop.permute.xlu0 %903
  %905 = vrot.lane.b32.xlu0 %v134, 127
  %v906 = vpop.permute.xlu0 %905
  %907 = vrot.lane.b32.xlu0 %v136, 127
  %v908 = vpop.permute.xlu0 %907
  %909 = vrot.lane.b32.xlu0 %v223, 127
  %v910 = vpop.permute.xlu0 %909
  %911 = vrot.lane.b32.xlu0 %v225, 127
  %v912 = vpop.permute.xlu0 %911
  %913 = vrot.lane.b32.xlu0 %v140, 127
  %v914 = vpop.permute.xlu0 %913
  %915 = vrot.lane.b32.xlu0 %v142, 127
  %v916 = vpop.permute.xlu0 %915
  %917 = vrot.lane.b32.xlu0 %v229, 127
  %v918 = vpop.permute.xlu0 %917
  %919 = vrot.lane.b32.xlu0 %v231, 127
  %v920 = vpop.permute.xlu0 %919
  %vm921 = vcmask 1039360
  %v922 = vsel %vm921, %v890, %v892
  %v923 = vsel %vm921, %v892, %v894
  %v924 = vsel %vm921, %v894, %v896
  %v925 = vsel %vm921, %v898, %v900
  %v926 = vsel %vm921, %v900, %v902
  %v927 = vsel %vm921, %v902, %v904
  %v928 = vsel %vm921, %v906, %v908
  %v929 = vsel %vm921, %v908, %v910
  %v930 = vsel %vm921, %v910, %v912
  %v931 = vsel %vm921, %v914, %v916
  %v932 = vsel %vm921, %v916, %v918
  %v933 = vsel %vm921, %v918, %v920
  %v954 = vsel %vm921, %v896, %v890
  %v955 = vsel %vm921, %v904, %v898
  %v956 = vsel %vm921, %v912, %v906
  %v957 = vsel %vm921, %v920, %v914
  %v958 = vlaneseq
  %v959 = vshrl.u32 %v958, 7
  %v960 = vsub.s32 4, %v959
  %v961 = vrot.slane %v233, %v960
  %v962 = vlaneseq
  %v963 = vshrl.u32 %v962, 7
  %v964 = vsub.s32 4, %v963
  %v965 = vrot.slane %v234, %v964
  %v966 = vlaneseq
  %v967 = vshrl.u32 %v966, 7
  %v968 = vsub.s32 4, %v967
  %v969 = vrot.slane %v235, %v968
  %v970 = vlaneseq
  %v971 = vshrl.u32 %v970, 7
  %v972 = vsub.s32 4, %v971
  %v973 = vrot.slane %v236, %v972
  %v974 = vmul.f32 %v922, %v961
  %v975 = vmul.f32 %v923, %v965
  %v976 = vmul.f32 %v924, %v969
  %v977 = vmul.f32 %v954, %v973
  %v978 = vmul.f32 %v925, %v961
  %v979 = vmul.f32 %v926, %v965
  %v980 = vmul.f32 %v927, %v969
  %v981 = vmul.f32 %v955, %v973
  %v982 = vmul.f32 %v928, %v961
  %v983 = vmul.f32 %v929, %v965
  %v984 = vmul.f32 %v930, %v969
  %v985 = vmul.f32 %v956, %v973
  %v986 = vmul.f32 %v931, %v961
  %v987 = vmul.f32 %v932, %v965
  %v988 = vmul.f32 %v933, %v969
  %v989 = vmul.f32 %v957, %v973
  %990 = vset.pattern.permute.xlu0 5
  %991 = vperm.xlu0 %990, %v237
  %v992 = vpop.permute.xlu0 %991
  %994 = vset.pattern.permute.xlu0 5
  %995 = vperm.xlu0 %994, %v238
  %v996 = vpop.permute.xlu0 %995
  %998 = vset.pattern.permute.xlu0 5
  %999 = vperm.xlu0 %998, %v239
  %v1000 = vpop.permute.xlu0 %999
  %1002 = vset.pattern.permute.xlu0 5
  %1003 = vperm.xlu0 %1002, %v240
  %v1004 = vpop.permute.xlu0 %1003
  %v1006 = vmul.f32 %v974, %v992
  %v1007 = vmul.f32 %v975, %v992
  %v1008 = vmul.f32 %v976, %v992
  %v1009 = vmul.f32 %v977, %v992
  %v1010 = vmul.f32 %v978, %v996
  %v1011 = vmul.f32 %v979, %v996
  %v1012 = vmul.f32 %v980, %v996
  %v1013 = vmul.f32 %v981, %v996
  %v1014 = vmul.f32 %v982, %v1000
  %v1015 = vmul.f32 %v983, %v1000
  %v1016 = vmul.f32 %v984, %v1000
  %v1017 = vmul.f32 %v985, %v1000
  %v1018 = vmul.f32 %v986, %v1004
  %v1019 = vmul.f32 %v987, %v1004
  %v1020 = vmul.f32 %v988, %v1004
  %v1021 = vmul.f32 %v989, %v1004
  %v1022 = vadd.f32 %v873, %v1006
  %v1023 = vadd.f32 %v874, %v1007
  %v1024 = vadd.f32 %v875, %v1008
  %v1025 = vadd.f32 %v876, %v1009
  %v1026 = vadd.f32 %v877, %v1010
  %v1027 = vadd.f32 %v878, %v1011
  %v1028 = vadd.f32 %v879, %v1012
  %v1029 = vadd.f32 %v880, %v1013
  %v1030 = vadd.f32 %v881, %v1014
  %v1031 = vadd.f32 %v882, %v1015
  %v1032 = vadd.f32 %v883, %v1016
  %v1033 = vadd.f32 %v884, %v1017
  %v1034 = vadd.f32 %v885, %v1018
  %v1035 = vadd.f32 %v886, %v1019
  %v1036 = vadd.f32 %v887, %v1020
  %v1037 = vadd.f32 %v888, %v1021
  %1038 = vrot.lane.b32.xlu0 %v122, 113
  %v1039 = vpop.permute.xlu0 %1038
  %1040 = vrot.lane.b32.xlu0 %v124, 113
  %v1041 = vpop.permute.xlu0 %1040
  %1042 = vrot.lane.b32.xlu0 %v211, 113
  %v1043 = vpop.permute.xlu0 %1042
  %1044 = vrot.lane.b32.xlu0 %v213, 113
  %v1045 = vpop.permute.xlu0 %1044
  %1046 = vrot.lane.b32.xlu0 %v128, 113
  %v1047 = vpop.permute.xlu0 %1046
  %1048 = vrot.lane.b32.xlu0 %v130, 113
  %v1049 = vpop.permute.xlu0 %1048
  %1050 = vrot.lane.b32.xlu0 %v217, 113
  %v1051 = vpop.permute.xlu0 %1050
  %1052 = vrot.lane.b32.xlu0 %v219, 113
  %v1053 = vpop.permute.xlu0 %1052
  %1054 = vrot.lane.b32.xlu0 %v134, 113
  %v1055 = vpop.permute.xlu0 %1054
  %1056 = vrot.lane.b32.xlu0 %v136, 113
  %v1057 = vpop.permute.xlu0 %1056
  %1058 = vrot.lane.b32.xlu0 %v223, 113
  %v1059 = vpop.permute.xlu0 %1058
  %1060 = vrot.lane.b32.xlu0 %v225, 113
  %v1061 = vpop.permute.xlu0 %1060
  %1062 = vrot.lane.b32.xlu0 %v140, 113
  %v1063 = vpop.permute.xlu0 %1062
  %1064 = vrot.lane.b32.xlu0 %v142, 113
  %v1065 = vpop.permute.xlu0 %1064
  %1066 = vrot.lane.b32.xlu0 %v229, 113
  %v1067 = vpop.permute.xlu0 %1066
  %1068 = vrot.lane.b32.xlu0 %v231, 113
  %v1069 = vpop.permute.xlu0 %1068
  %vm1070 = vcmask 924672
  %v1071 = vsel %vm1070, %v1039, %v1041
  %v1072 = vsel %vm1070, %v1041, %v1043
  %v1073 = vsel %vm1070, %v1043, %v1045
  %v1074 = vsel %vm1070, %v1047, %v1049
  %v1075 = vsel %vm1070, %v1049, %v1051
  %v1076 = vsel %vm1070, %v1051, %v1053
  %v1077 = vsel %vm1070, %v1055, %v1057
  %v1078 = vsel %vm1070, %v1057, %v1059
  %v1079 = vsel %vm1070, %v1059, %v1061
  %v1080 = vsel %vm1070, %v1063, %v1065
  %v1081 = vsel %vm1070, %v1065, %v1067
  %v1082 = vsel %vm1070, %v1067, %v1069
  %v1103 = vsel %vm1070, %v1045, %v1039
  %v1104 = vsel %vm1070, %v1053, %v1047
  %v1105 = vsel %vm1070, %v1061, %v1055
  %v1106 = vsel %vm1070, %v1069, %v1063
  %v1107 = vlaneseq
  %v1108 = vshrl.u32 %v1107, 7
  %v1109 = vsub.s32 5, %v1108
  %v1110 = vrot.slane %v233, %v1109
  %v1111 = vlaneseq
  %v1112 = vshrl.u32 %v1111, 7
  %v1113 = vsub.s32 5, %v1112
  %v1114 = vrot.slane %v234, %v1113
  %v1115 = vlaneseq
  %v1116 = vshrl.u32 %v1115, 7
  %v1117 = vsub.s32 5, %v1116
  %v1118 = vrot.slane %v235, %v1117
  %v1119 = vlaneseq
  %v1120 = vshrl.u32 %v1119, 7
  %v1121 = vsub.s32 5, %v1120
  %v1122 = vrot.slane %v236, %v1121
  %v1123 = vmul.f32 %v1071, %v1110
  %v1124 = vmul.f32 %v1072, %v1114
  %v1125 = vmul.f32 %v1073, %v1118
  %v1126 = vmul.f32 %v1103, %v1122
  %v1127 = vmul.f32 %v1074, %v1110
  %v1128 = vmul.f32 %v1075, %v1114
  %v1129 = vmul.f32 %v1076, %v1118
  %v1130 = vmul.f32 %v1104, %v1122
  %v1131 = vmul.f32 %v1077, %v1110
  %v1132 = vmul.f32 %v1078, %v1114
  %v1133 = vmul.f32 %v1079, %v1118
  %v1134 = vmul.f32 %v1105, %v1122
  %v1135 = vmul.f32 %v1080, %v1110
  %v1136 = vmul.f32 %v1081, %v1114
  %v1137 = vmul.f32 %v1082, %v1118
  %v1138 = vmul.f32 %v1106, %v1122
  %1139 = vset.pattern.permute.xlu0 6
  %1140 = vperm.xlu0 %1139, %v237
  %v1141 = vpop.permute.xlu0 %1140
  %1143 = vset.pattern.permute.xlu0 6
  %1144 = vperm.xlu0 %1143, %v238
  %v1145 = vpop.permute.xlu0 %1144
  %1147 = vset.pattern.permute.xlu0 6
  %1148 = vperm.xlu0 %1147, %v239
  %v1149 = vpop.permute.xlu0 %1148
  %1151 = vset.pattern.permute.xlu0 6
  %1152 = vperm.xlu0 %1151, %v240
  %v1153 = vpop.permute.xlu0 %1152
  %v1155 = vmul.f32 %v1123, %v1141
  %v1156 = vmul.f32 %v1124, %v1141
  %v1157 = vmul.f32 %v1125, %v1141
  %v1158 = vmul.f32 %v1126, %v1141
  %v1159 = vmul.f32 %v1127, %v1145
  %v1160 = vmul.f32 %v1128, %v1145
  %v1161 = vmul.f32 %v1129, %v1145
  %v1162 = vmul.f32 %v1130, %v1145
  %v1163 = vmul.f32 %v1131, %v1149
  %v1164 = vmul.f32 %v1132, %v1149
  %v1165 = vmul.f32 %v1133, %v1149
  %v1166 = vmul.f32 %v1134, %v1149
  %v1167 = vmul.f32 %v1135, %v1153
  %v1168 = vmul.f32 %v1136, %v1153
  %v1169 = vmul.f32 %v1137, %v1153
  %v1170 = vmul.f32 %v1138, %v1153
  %v1171 = vadd.f32 %v1022, %v1155
  %v1172 = vadd.f32 %v1023, %v1156
  %v1173 = vadd.f32 %v1024, %v1157
  %v1174 = vadd.f32 %v1025, %v1158
  %v1175 = vadd.f32 %v1026, %v1159
  %v1176 = vadd.f32 %v1027, %v1160
  %v1177 = vadd.f32 %v1028, %v1161
  %v1178 = vadd.f32 %v1029, %v1162
  %v1179 = vadd.f32 %v1030, %v1163
  %v1180 = vadd.f32 %v1031, %v1164
  %v1181 = vadd.f32 %v1032, %v1165
  %v1182 = vadd.f32 %v1033, %v1166
  %v1183 = vadd.f32 %v1034, %v1167
  %v1184 = vadd.f32 %v1035, %v1168
  %v1185 = vadd.f32 %v1036, %v1169
  %v1186 = vadd.f32 %v1037, %v1170
  %1187 = vrot.lane.b32.xlu0 %v122, 112
  %v1188 = vpop.permute.xlu0 %1187
  %1189 = vrot.lane.b32.xlu0 %v124, 112
  %v1190 = vpop.permute.xlu0 %1189
  %1191 = vrot.lane.b32.xlu0 %v211, 112
  %v1192 = vpop.permute.xlu0 %1191
  %1193 = vrot.lane.b32.xlu0 %v213, 112
  %v1194 = vpop.permute.xlu0 %1193
  %1195 = vrot.lane.b32.xlu0 %v128, 112
  %v1196 = vpop.permute.xlu0 %1195
  %1197 = vrot.lane.b32.xlu0 %v130, 112
  %v1198 = vpop.permute.xlu0 %1197
  %1199 = vrot.lane.b32.xlu0 %v217, 112
  %v1200 = vpop.permute.xlu0 %1199
  %1201 = vrot.lane.b32.xlu0 %v219, 112
  %v1202 = vpop.permute.xlu0 %1201
  %1203 = vrot.lane.b32.xlu0 %v134, 112
  %v1204 = vpop.permute.xlu0 %1203
  %1205 = vrot.lane.b32.xlu0 %v136, 112
  %v1206 = vpop.permute.xlu0 %1205
  %1207 = vrot.lane.b32.xlu0 %v223, 112
  %v1208 = vpop.permute.xlu0 %1207
  %1209 = vrot.lane.b32.xlu0 %v225, 112
  %v1210 = vpop.permute.xlu0 %1209
  %1211 = vrot.lane.b32.xlu0 %v140, 112
  %v1212 = vpop.permute.xlu0 %1211
  %1213 = vrot.lane.b32.xlu0 %v142, 112
  %v1214 = vpop.permute.xlu0 %1213
  %1215 = vrot.lane.b32.xlu0 %v229, 112
  %v1216 = vpop.permute.xlu0 %1215
  %1217 = vrot.lane.b32.xlu0 %v231, 112
  %v1218 = vpop.permute.xlu0 %1217
  %vm1219 = vcmask 916480
  %v1220 = vsel %vm1219, %v1188, %v1190
  %v1221 = vsel %vm1219, %v1190, %v1192
  %v1222 = vsel %vm1219, %v1192, %v1194
  %v1223 = vsel %vm1219, %v1196, %v1198
  %v1224 = vsel %vm1219, %v1198, %v1200
  %v1225 = vsel %vm1219, %v1200, %v1202
  %v1226 = vsel %vm1219, %v1204, %v1206
  %v1227 = vsel %vm1219, %v1206, %v1208
  %v1228 = vsel %vm1219, %v1208, %v1210
  %v1229 = vsel %vm1219, %v1212, %v1214
  %v1230 = vsel %vm1219, %v1214, %v1216
  %v1231 = vsel %vm1219, %v1216, %v1218
  %v1252 = vsel %vm1219, %v1194, %v1188
  %v1253 = vsel %vm1219, %v1202, %v1196
  %v1254 = vsel %vm1219, %v1210, %v1204
  %v1255 = vsel %vm1219, %v1218, %v1212
  %v1256 = vlaneseq
  %v1257 = vshrl.u32 %v1256, 7
  %v1258 = vsub.s32 6, %v1257
  %v1259 = vrot.slane %v233, %v1258
  %v1260 = vlaneseq
  %v1261 = vshrl.u32 %v1260, 7
  %v1262 = vsub.s32 6, %v1261
  %v1263 = vrot.slane %v234, %v1262
  %v1264 = vlaneseq
  %v1265 = vshrl.u32 %v1264, 7
  %v1266 = vsub.s32 6, %v1265
  %v1267 = vrot.slane %v235, %v1266
  %v1268 = vlaneseq
  %v1269 = vshrl.u32 %v1268, 7
  %v1270 = vsub.s32 6, %v1269
  %v1271 = vrot.slane %v236, %v1270
  %v1272 = vmul.f32 %v1220, %v1259
  %v1273 = vmul.f32 %v1221, %v1263
  %v1274 = vmul.f32 %v1222, %v1267
  %v1275 = vmul.f32 %v1252, %v1271
  %v1276 = vmul.f32 %v1223, %v1259
  %v1277 = vmul.f32 %v1224, %v1263
  %v1278 = vmul.f32 %v1225, %v1267
  %v1279 = vmul.f32 %v1253, %v1271
  %v1280 = vmul.f32 %v1226, %v1259
  %v1281 = vmul.f32 %v1227, %v1263
  %v1282 = vmul.f32 %v1228, %v1267
  %v1283 = vmul.f32 %v1254, %v1271
  %v1284 = vmul.f32 %v1229, %v1259
  %v1285 = vmul.f32 %v1230, %v1263
  %v1286 = vmul.f32 %v1231, %v1267
  %v1287 = vmul.f32 %v1255, %v1271
  %1288 = vset.pattern.permute.xlu0 7
  %1289 = vperm.xlu0 %1288, %v237
  %v1290 = vpop.permute.xlu0 %1289
  %1292 = vset.pattern.permute.xlu0 7
  %1293 = vperm.xlu0 %1292, %v238
  %v1294 = vpop.permute.xlu0 %1293
  %1296 = vset.pattern.permute.xlu0 7
  %1297 = vperm.xlu0 %1296, %v239
  %v1298 = vpop.permute.xlu0 %1297
  %1300 = vset.pattern.permute.xlu0 7
  %1301 = vperm.xlu0 %1300, %v240
  %v1302 = vpop.permute.xlu0 %1301
  %v1304 = vmul.f32 %v1272, %v1290
  %v1305 = vmul.f32 %v1273, %v1290
  %v1306 = vmul.f32 %v1274, %v1290
  %v1307 = vmul.f32 %v1275, %v1290
  %v1308 = vmul.f32 %v1276, %v1294
  %v1309 = vmul.f32 %v1277, %v1294
  %v1310 = vmul.f32 %v1278, %v1294
  %v1311 = vmul.f32 %v1279, %v1294
  %v1312 = vmul.f32 %v1280, %v1298
  %v1313 = vmul.f32 %v1281, %v1298
  %v1314 = vmul.f32 %v1282, %v1298
  %v1315 = vmul.f32 %v1283, %v1298
  %v1316 = vmul.f32 %v1284, %v1302
  %v1317 = vmul.f32 %v1285, %v1302
  %v1318 = vmul.f32 %v1286, %v1302
  %v1319 = vmul.f32 %v1287, %v1302
  %v1320 = vadd.f32 %v1171, %v1304
  %v1321 = vadd.f32 %v1172, %v1305
  %v1322 = vadd.f32 %v1173, %v1306
  %v1323 = vadd.f32 %v1174, %v1307
  %v1324 = vadd.f32 %v1175, %v1308
  %v1325 = vadd.f32 %v1176, %v1309
  %v1326 = vadd.f32 %v1177, %v1310
  %v1327 = vadd.f32 %v1178, %v1311
  %v1328 = vadd.f32 %v1179, %v1312
  %v1329 = vadd.f32 %v1180, %v1313
  %v1330 = vadd.f32 %v1181, %v1314
  %v1331 = vadd.f32 %v1182, %v1315
  %v1332 = vadd.f32 %v1183, %v1316
  %v1333 = vadd.f32 %v1184, %v1317
  %v1334 = vadd.f32 %v1185, %v1318
  %v1335 = vadd.f32 %v1186, %v1319
  %1336 = vrot.lane.b32.xlu0 %v122, 111
  %v1337 = vpop.permute.xlu0 %1336
  %1338 = vrot.lane.b32.xlu0 %v124, 111
  %v1339 = vpop.permute.xlu0 %1338
  %1340 = vrot.lane.b32.xlu0 %v211, 111
  %v1341 = vpop.permute.xlu0 %1340
  %1342 = vrot.lane.b32.xlu0 %v213, 111
  %v1343 = vpop.permute.xlu0 %1342
  %1344 = vrot.lane.b32.xlu0 %v128, 111
  %v1345 = vpop.permute.xlu0 %1344
  %1346 = vrot.lane.b32.xlu0 %v130, 111
  %v1347 = vpop.permute.xlu0 %1346
  %1348 = vrot.lane.b32.xlu0 %v217, 111
  %v1349 = vpop.permute.xlu0 %1348
  %1350 = vrot.lane.b32.xlu0 %v219, 111
  %v1351 = vpop.permute.xlu0 %1350
  %1352 = vrot.lane.b32.xlu0 %v134, 111
  %v1353 = vpop.permute.xlu0 %1352
  %1354 = vrot.lane.b32.xlu0 %v136, 111
  %v1355 = vpop.permute.xlu0 %1354
  %1356 = vrot.lane.b32.xlu0 %v223, 111
  %v1357 = vpop.permute.xlu0 %1356
  %1358 = vrot.lane.b32.xlu0 %v225, 111
  %v1359 = vpop.permute.xlu0 %1358
  %1360 = vrot.lane.b32.xlu0 %v140, 111
  %v1361 = vpop.permute.xlu0 %1360
  %1362 = vrot.lane.b32.xlu0 %v142, 111
  %v1363 = vpop.permute.xlu0 %1362
  %1364 = vrot.lane.b32.xlu0 %v229, 111
  %v1365 = vpop.permute.xlu0 %1364
  %1366 = vrot.lane.b32.xlu0 %v231, 111
  %v1367 = vpop.permute.xlu0 %1366
  %vm1368 = vcmask 908288
  %v1369 = vsel %vm1368, %v1337, %v1339
  %v1370 = vsel %vm1368, %v1339, %v1341
  %v1371 = vsel %vm1368, %v1341, %v1343
  %v1372 = vsel %vm1368, %v1345, %v1347
  %v1373 = vsel %vm1368, %v1347, %v1349
  %v1374 = vsel %vm1368, %v1349, %v1351
  %v1375 = vsel %vm1368, %v1353, %v1355
  %v1376 = vsel %vm1368, %v1355, %v1357
  %v1377 = vsel %vm1368, %v1357, %v1359
  %v1378 = vsel %vm1368, %v1361, %v1363
  %v1379 = vsel %vm1368, %v1363, %v1365
  %v1380 = vsel %vm1368, %v1365, %v1367
  %v1401 = vsel %vm1368, %v1343, %v1337
  %v1402 = vsel %vm1368, %v1351, %v1345
  %v1403 = vsel %vm1368, %v1359, %v1353
  %v1404 = vsel %vm1368, %v1367, %v1361
  %v1405 = vlaneseq
  %v1406 = vshrl.u32 %v1405, 7
  %v1407 = vsub.s32 7, %v1406
  %v1408 = vrot.slane %v233, %v1407
  %v1409 = vlaneseq
  %v1410 = vshrl.u32 %v1409, 7
  %v1411 = vsub.s32 7, %v1410
  %v1412 = vrot.slane %v234, %v1411
  %v1413 = vlaneseq
  %v1414 = vshrl.u32 %v1413, 7
  %v1415 = vsub.s32 7, %v1414
  %v1416 = vrot.slane %v235, %v1415
  %v1417 = vlaneseq
  %v1418 = vshrl.u32 %v1417, 7
  %v1419 = vsub.s32 7, %v1418
  %v1420 = vrot.slane %v236, %v1419
  %v1421 = vmul.f32 %v1369, %v1408
  %v1422 = vmul.f32 %v1370, %v1412
  %v1423 = vmul.f32 %v1371, %v1416
  %v1424 = vmul.f32 %v1401, %v1420
  %v1425 = vmul.f32 %v1372, %v1408
  %v1426 = vmul.f32 %v1373, %v1412
  %v1427 = vmul.f32 %v1374, %v1416
  %v1428 = vmul.f32 %v1402, %v1420
  %v1429 = vmul.f32 %v1375, %v1408
  %v1430 = vmul.f32 %v1376, %v1412
  %v1431 = vmul.f32 %v1377, %v1416
  %v1432 = vmul.f32 %v1403, %v1420
  %v1433 = vmul.f32 %v1378, %v1408
  %v1434 = vmul.f32 %v1379, %v1412
  %v1435 = vmul.f32 %v1380, %v1416
  %v1436 = vmul.f32 %v1404, %v1420
  %1437 = vset.pattern.permute.xlu0 8
  %1438 = vperm.xlu0 %1437, %v237
  %v1439 = vpop.permute.xlu0 %1438
  %1441 = vset.pattern.permute.xlu0 8
  %1442 = vperm.xlu0 %1441, %v238
  %v1443 = vpop.permute.xlu0 %1442
  %1445 = vset.pattern.permute.xlu0 8
  %1446 = vperm.xlu0 %1445, %v239
  %v1447 = vpop.permute.xlu0 %1446
  %1449 = vset.pattern.permute.xlu0 8
  %1450 = vperm.xlu0 %1449, %v240
  %v1451 = vpop.permute.xlu0 %1450
  %v1453 = vmul.f32 %v1421, %v1439
  %v1454 = vmul.f32 %v1422, %v1439
  %v1455 = vmul.f32 %v1423, %v1439
  %v1456 = vmul.f32 %v1424, %v1439
  %v1457 = vmul.f32 %v1425, %v1443
  %v1458 = vmul.f32 %v1426, %v1443
  %v1459 = vmul.f32 %v1427, %v1443
  %v1460 = vmul.f32 %v1428, %v1443
  %v1461 = vmul.f32 %v1429, %v1447
  %v1462 = vmul.f32 %v1430, %v1447
  %v1463 = vmul.f32 %v1431, %v1447
  %v1464 = vmul.f32 %v1432, %v1447
  %v1465 = vmul.f32 %v1433, %v1451
  %v1466 = vmul.f32 %v1434, %v1451
  %v1467 = vmul.f32 %v1435, %v1451
  %v1468 = vmul.f32 %v1436, %v1451
  %v1469 = vadd.f32 %v1320, %v1453
  %v1470 = vadd.f32 %v1321, %v1454
  %v1471 = vadd.f32 %v1322, %v1455
  %v1472 = vadd.f32 %v1323, %v1456
  %v1473 = vadd.f32 %v1324, %v1457
  %v1474 = vadd.f32 %v1325, %v1458
  %v1475 = vadd.f32 %v1326, %v1459
  %v1476 = vadd.f32 %v1327, %v1460
  %v1477 = vadd.f32 %v1328, %v1461
  %v1478 = vadd.f32 %v1329, %v1462
  %v1479 = vadd.f32 %v1330, %v1463
  %v1480 = vadd.f32 %v1331, %v1464
  %v1481 = vadd.f32 %v1332, %v1465
  %v1482 = vadd.f32 %v1333, %v1466
  %v1483 = vadd.f32 %v1334, %v1467
  %v1484 = vadd.f32 %v1335, %v1468
  %v1485 = vld [vmem:[%s4] sm:$0xff]
  %v1486 = vld [vmem:[%s4 + $0x8] sm:$0xff]
  %v1487 = vld [vmem:[%s4 + $0x10] sm:$0xff]
  %v1488 = vld [vmem:[%s4 + $0x18] sm:$0xff]
  %1490 = vset.pattern.permute.xlu0 4
  %1491 = vperm.xlu0 %1490, %v1485
  %v1492 = vpop.permute.xlu0 %1491
  %1495 = vset.pattern.permute.xlu0 4
  %1496 = vperm.xlu0 %1495, %v1486
  %v1497 = vpop.permute.xlu0 %1496
  %1500 = vset.pattern.permute.xlu0 4
  %1501 = vperm.xlu0 %1500, %v1487
  %v1502 = vpop.permute.xlu0 %1501
  %1505 = vset.pattern.permute.xlu0 4
  %1506 = vperm.xlu0 %1505, %v1488
  %v1507 = vpop.permute.xlu0 %1506
  %v1509 = vmul.f32 %v1469, %v1492
  %v1510 = vmul.f32 %v1470, %v1492
  %v1511 = vmul.f32 %v1471, %v1492
  %v1512 = vmul.f32 %v1472, %v1492
  %v1513 = vmul.f32 %v1473, %v1497
  %v1514 = vmul.f32 %v1474, %v1497
  %v1515 = vmul.f32 %v1475, %v1497
  %v1516 = vmul.f32 %v1476, %v1497
  %v1517 = vmul.f32 %v1477, %v1502
  %v1518 = vmul.f32 %v1478, %v1502
  %v1519 = vmul.f32 %v1479, %v1502
  %v1520 = vmul.f32 %v1480, %v1502
  %v1521 = vmul.f32 %v1481, %v1507
  %v1522 = vmul.f32 %v1482, %v1507
  %v1523 = vmul.f32 %v1483, %v1507
  %v1524 = vmul.f32 %v1484, %v1507
  %1529 = vrot.lane.b32.xlu0 %v1472, 17
  %v1530 = vpop.permute.xlu0 %1529
  %1531 = vrot.lane.b32.xlu0 %v1476, 17
  %v1532 = vpop.permute.xlu0 %1531
  %1533 = vrot.lane.b32.xlu0 %v1480, 17
  %v1534 = vpop.permute.xlu0 %1533
  %1535 = vrot.lane.b32.xlu0 %v1484, 17
  %v1536 = vpop.permute.xlu0 %1535
  %1553 = vrot.lane.b32.xlu0 %v1469, 17
  %v1554 = vpop.permute.xlu0 %1553
  %1555 = vrot.lane.b32.xlu0 %v1470, 17
  %v1556 = vpop.permute.xlu0 %1555
  %1557 = vrot.lane.b32.xlu0 %v1471, 17
  %v1558 = vpop.permute.xlu0 %1557
  %1559 = vrot.lane.b32.xlu0 %v1473, 17
  %v1560 = vpop.permute.xlu0 %1559
  %1561 = vrot.lane.b32.xlu0 %v1474, 17
  %v1562 = vpop.permute.xlu0 %1561
  %1563 = vrot.lane.b32.xlu0 %v1475, 17
  %v1564 = vpop.permute.xlu0 %1563
  %1565 = vrot.lane.b32.xlu0 %v1477, 17
  %v1566 = vpop.permute.xlu0 %1565
  %1567 = vrot.lane.b32.xlu0 %v1478, 17
  %v1568 = vpop.permute.xlu0 %1567
  %1569 = vrot.lane.b32.xlu0 %v1479, 17
  %v1570 = vpop.permute.xlu0 %1569
  %1571 = vrot.lane.b32.xlu0 %v1481, 17
  %v1572 = vpop.permute.xlu0 %1571
  %1573 = vrot.lane.b32.xlu0 %v1482, 17
  %v1574 = vpop.permute.xlu0 %1573
  %1575 = vrot.lane.b32.xlu0 %v1483, 17
  %v1576 = vpop.permute.xlu0 %1575
  %v1577 = vsel %vm329, %v1554, %v1556
  %v1578 = vsel %vm329, %v1556, %v1558
  %v1579 = vsel %vm329, %v1558, %v1530
  %v1580 = vsel %vm329, %v1560, %v1562
  %v1581 = vsel %vm329, %v1562, %v1564
  %v1582 = vsel %vm329, %v1564, %v1532
  %v1583 = vsel %vm329, %v1566, %v1568
  %v1584 = vsel %vm329, %v1568, %v1570
  %v1585 = vsel %vm329, %v1570, %v1534
  %v1586 = vsel %vm329, %v1572, %v1574
  %v1587 = vsel %vm329, %v1574, %v1576
  %v1588 = vsel %vm329, %v1576, %v1536
  %v1605 = vsel %vm329, %v1530, %v1554
  %v1606 = vsel %vm329, %v1532, %v1560
  %v1607 = vsel %vm329, %v1534, %v1566
  %v1608 = vsel %vm329, %v1536, %v1572
  %v1609 = vmul.f32 %v1605, %v365
  %v1610 = vmul.f32 %v1577, %v369
  %v1611 = vmul.f32 %v1578, %v373
  %v1612 = vmul.f32 %v1579, %v377
  %v1613 = vmul.f32 %v1606, %v365
  %v1614 = vmul.f32 %v1580, %v369
  %v1615 = vmul.f32 %v1581, %v373
  %v1616 = vmul.f32 %v1582, %v377
  %v1617 = vmul.f32 %v1607, %v365
  %v1618 = vmul.f32 %v1583, %v369
  %v1619 = vmul.f32 %v1584, %v373
  %v1620 = vmul.f32 %v1585, %v377
  %v1621 = vmul.f32 %v1608, %v365
  %v1622 = vmul.f32 %v1586, %v369
  %v1623 = vmul.f32 %v1587, %v373
  %v1624 = vmul.f32 %v1588, %v377
  %1625 = vset.pattern.permute.xlu0 0
  %1626 = vperm.xlu0 %1625, %v1485
  %v1627 = vpop.permute.xlu0 %1626
  %1629 = vset.pattern.permute.xlu0 0
  %1630 = vperm.xlu0 %1629, %v1486
  %v1631 = vpop.permute.xlu0 %1630
  %1633 = vset.pattern.permute.xlu0 0
  %1634 = vperm.xlu0 %1633, %v1487
  %v1635 = vpop.permute.xlu0 %1634
  %1637 = vset.pattern.permute.xlu0 0
  %1638 = vperm.xlu0 %1637, %v1488
  %v1639 = vpop.permute.xlu0 %1638
  %v1641 = vmul.f32 %v1609, %v1627
  %v1642 = vmul.f32 %v1610, %v1627
  %v1643 = vmul.f32 %v1611, %v1627
  %v1644 = vmul.f32 %v1612, %v1627
  %v1645 = vmul.f32 %v1613, %v1631
  %v1646 = vmul.f32 %v1614, %v1631
  %v1647 = vmul.f32 %v1615, %v1631
  %v1648 = vmul.f32 %v1616, %v1631
  %v1649 = vmul.f32 %v1617, %v1635
  %v1650 = vmul.f32 %v1618, %v1635
  %v1651 = vmul.f32 %v1619, %v1635
  %v1652 = vmul.f32 %v1620, %v1635
  %v1653 = vmul.f32 %v1621, %v1639
  %v1654 = vmul.f32 %v1622, %v1639
  %v1655 = vmul.f32 %v1623, %v1639
  %v1656 = vmul.f32 %v1624, %v1639
  %v1657 = vadd.f32 %v1509, %v1641
  %v1658 = vadd.f32 %v1510, %v1642
  %v1659 = vadd.f32 %v1511, %v1643
  %v1660 = vadd.f32 %v1512, %v1644
  %v1661 = vadd.f32 %v1513, %v1645
  %v1662 = vadd.f32 %v1514, %v1646
  %v1663 = vadd.f32 %v1515, %v1647
  %v1664 = vadd.f32 %v1516, %v1648
  %v1665 = vadd.f32 %v1517, %v1649
  %v1666 = vadd.f32 %v1518, %v1650
  %v1667 = vadd.f32 %v1519, %v1651
  %v1668 = vadd.f32 %v1520, %v1652
  %v1669 = vadd.f32 %v1521, %v1653
  %v1670 = vadd.f32 %v1522, %v1654
  %v1671 = vadd.f32 %v1523, %v1655
  %v1672 = vadd.f32 %v1524, %v1656
  %1673 = vrot.lane.b32.xlu0 %v1472, 16
  %v1674 = vpop.permute.xlu0 %1673
  %1675 = vrot.lane.b32.xlu0 %v1476, 16
  %v1676 = vpop.permute.xlu0 %1675
  %1677 = vrot.lane.b32.xlu0 %v1480, 16
  %v1678 = vpop.permute.xlu0 %1677
  %1679 = vrot.lane.b32.xlu0 %v1484, 16
  %v1680 = vpop.permute.xlu0 %1679
  %1685 = vrot.lane.b32.xlu0 %v1469, 16
  %v1686 = vpop.permute.xlu0 %1685
  %1687 = vrot.lane.b32.xlu0 %v1470, 16
  %v1688 = vpop.permute.xlu0 %1687
  %1689 = vrot.lane.b32.xlu0 %v1471, 16
  %v1690 = vpop.permute.xlu0 %1689
  %1691 = vrot.lane.b32.xlu0 %v1473, 16
  %v1692 = vpop.permute.xlu0 %1691
  %1693 = vrot.lane.b32.xlu0 %v1474, 16
  %v1694 = vpop.permute.xlu0 %1693
  %1695 = vrot.lane.b32.xlu0 %v1475, 16
  %v1696 = vpop.permute.xlu0 %1695
  %1697 = vrot.lane.b32.xlu0 %v1477, 16
  %v1698 = vpop.permute.xlu0 %1697
  %1699 = vrot.lane.b32.xlu0 %v1478, 16
  %v1700 = vpop.permute.xlu0 %1699
  %1701 = vrot.lane.b32.xlu0 %v1479, 16
  %v1702 = vpop.permute.xlu0 %1701
  %1703 = vrot.lane.b32.xlu0 %v1481, 16
  %v1704 = vpop.permute.xlu0 %1703
  %1705 = vrot.lane.b32.xlu0 %v1482, 16
  %v1706 = vpop.permute.xlu0 %1705
  %1707 = vrot.lane.b32.xlu0 %v1483, 16
  %v1708 = vpop.permute.xlu0 %1707
  %v1709 = vsel %vm478, %v1686, %v1688
  %v1710 = vsel %vm478, %v1688, %v1690
  %v1711 = vsel %vm478, %v1690, %v1674
  %v1712 = vsel %vm478, %v1692, %v1694
  %v1713 = vsel %vm478, %v1694, %v1696
  %v1714 = vsel %vm478, %v1696, %v1676
  %v1715 = vsel %vm478, %v1698, %v1700
  %v1716 = vsel %vm478, %v1700, %v1702
  %v1717 = vsel %vm478, %v1702, %v1678
  %v1718 = vsel %vm478, %v1704, %v1706
  %v1719 = vsel %vm478, %v1706, %v1708
  %v1720 = vsel %vm478, %v1708, %v1680
  %v1737 = vsel %vm478, %v1674, %v1686
  %v1738 = vsel %vm478, %v1676, %v1692
  %v1739 = vsel %vm478, %v1678, %v1698
  %v1740 = vsel %vm478, %v1680, %v1704
  %v1741 = vmul.f32 %v1737, %v514
  %v1742 = vmul.f32 %v1709, %v518
  %v1743 = vmul.f32 %v1710, %v522
  %v1744 = vmul.f32 %v1711, %v526
  %v1745 = vmul.f32 %v1738, %v514
  %v1746 = vmul.f32 %v1712, %v518
  %v1747 = vmul.f32 %v1713, %v522
  %v1748 = vmul.f32 %v1714, %v526
  %v1749 = vmul.f32 %v1739, %v514
  %v1750 = vmul.f32 %v1715, %v518
  %v1751 = vmul.f32 %v1716, %v522
  %v1752 = vmul.f32 %v1717, %v526
  %v1753 = vmul.f32 %v1740, %v514
  %v1754 = vmul.f32 %v1718, %v518
  %v1755 = vmul.f32 %v1719, %v522
  %v1756 = vmul.f32 %v1720, %v526
  %1757 = vset.pattern.permute.xlu0 1
  %1758 = vperm.xlu0 %1757, %v1485
  %v1759 = vpop.permute.xlu0 %1758
  %1761 = vset.pattern.permute.xlu0 1
  %1762 = vperm.xlu0 %1761, %v1486
  %v1763 = vpop.permute.xlu0 %1762
  %1765 = vset.pattern.permute.xlu0 1
  %1766 = vperm.xlu0 %1765, %v1487
  %v1767 = vpop.permute.xlu0 %1766
  %1769 = vset.pattern.permute.xlu0 1
  %1770 = vperm.xlu0 %1769, %v1488
  %v1771 = vpop.permute.xlu0 %1770
  %v1773 = vmul.f32 %v1741, %v1759
  %v1774 = vmul.f32 %v1742, %v1759
  %v1775 = vmul.f32 %v1743, %v1759
  %v1776 = vmul.f32 %v1744, %v1759
  %v1777 = vmul.f32 %v1745, %v1763
  %v1778 = vmul.f32 %v1746, %v1763
  %v1779 = vmul.f32 %v1747, %v1763
  %v1780 = vmul.f32 %v1748, %v1763
  %v1781 = vmul.f32 %v1749, %v1767
  %v1782 = vmul.f32 %v1750, %v1767
  %v1783 = vmul.f32 %v1751, %v1767
  %v1784 = vmul.f32 %v1752, %v1767
  %v1785 = vmul.f32 %v1753, %v1771
  %v1786 = vmul.f32 %v1754, %v1771
  %v1787 = vmul.f32 %v1755, %v1771
  %v1788 = vmul.f32 %v1756, %v1771
  %v1789 = vadd.f32 %v1657, %v1773
  %v1790 = vadd.f32 %v1658, %v1774
  %v1791 = vadd.f32 %v1659, %v1775
  %v1792 = vadd.f32 %v1660, %v1776
  %v1793 = vadd.f32 %v1661, %v1777
  %v1794 = vadd.f32 %v1662, %v1778
  %v1795 = vadd.f32 %v1663, %v1779
  %v1796 = vadd.f32 %v1664, %v1780
  %v1797 = vadd.f32 %v1665, %v1781
  %v1798 = vadd.f32 %v1666, %v1782
  %v1799 = vadd.f32 %v1667, %v1783
  %v1800 = vadd.f32 %v1668, %v1784
  %v1801 = vadd.f32 %v1669, %v1785
  %v1802 = vadd.f32 %v1670, %v1786
  %v1803 = vadd.f32 %v1671, %v1787
  %v1804 = vadd.f32 %v1672, %v1788
  %1805 = vrot.lane.b32.xlu0 %v1472, 15
  %v1806 = vpop.permute.xlu0 %1805
  %1807 = vrot.lane.b32.xlu0 %v1476, 15
  %v1808 = vpop.permute.xlu0 %1807
  %1809 = vrot.lane.b32.xlu0 %v1480, 15
  %v1810 = vpop.permute.xlu0 %1809
  %1811 = vrot.lane.b32.xlu0 %v1484, 15
  %v1812 = vpop.permute.xlu0 %1811
  %1817 = vrot.lane.b32.xlu0 %v1469, 15
  %v1818 = vpop.permute.xlu0 %1817
  %1819 = vrot.lane.b32.xlu0 %v1470, 15
  %v1820 = vpop.permute.xlu0 %1819
  %1821 = vrot.lane.b32.xlu0 %v1471, 15
  %v1822 = vpop.permute.xlu0 %1821
  %1823 = vrot.lane.b32.xlu0 %v1473, 15
  %v1824 = vpop.permute.xlu0 %1823
  %1825 = vrot.lane.b32.xlu0 %v1474, 15
  %v1826 = vpop.permute.xlu0 %1825
  %1827 = vrot.lane.b32.xlu0 %v1475, 15
  %v1828 = vpop.permute.xlu0 %1827
  %1829 = vrot.lane.b32.xlu0 %v1477, 15
  %v1830 = vpop.permute.xlu0 %1829
  %1831 = vrot.lane.b32.xlu0 %v1478, 15
  %v1832 = vpop.permute.xlu0 %1831
  %1833 = vrot.lane.b32.xlu0 %v1479, 15
  %v1834 = vpop.permute.xlu0 %1833
  %1835 = vrot.lane.b32.xlu0 %v1481, 15
  %v1836 = vpop.permute.xlu0 %1835
  %1837 = vrot.lane.b32.xlu0 %v1482, 15
  %v1838 = vpop.permute.xlu0 %1837
  %1839 = vrot.lane.b32.xlu0 %v1483, 15
  %v1840 = vpop.permute.xlu0 %1839
  %v1841 = vsel %vm627, %v1818, %v1820
  %v1842 = vsel %vm627, %v1820, %v1822
  %v1843 = vsel %vm627, %v1822, %v1806
  %v1844 = vsel %vm627, %v1824, %v1826
  %v1845 = vsel %vm627, %v1826, %v1828
  %v1846 = vsel %vm627, %v1828, %v1808
  %v1847 = vsel %vm627, %v1830, %v1832
  %v1848 = vsel %vm627, %v1832, %v1834
  %v1849 = vsel %vm627, %v1834, %v1810
  %v1850 = vsel %vm627, %v1836, %v1838
  %v1851 = vsel %vm627, %v1838, %v1840
  %v1852 = vsel %vm627, %v1840, %v1812
  %v1869 = vsel %vm627, %v1806, %v1818
  %v1870 = vsel %vm627, %v1808, %v1824
  %v1871 = vsel %vm627, %v1810, %v1830
  %v1872 = vsel %vm627, %v1812, %v1836
  %v1873 = vmul.f32 %v1869, %v663
  %v1874 = vmul.f32 %v1841, %v667
  %v1875 = vmul.f32 %v1842, %v671
  %v1876 = vmul.f32 %v1843, %v675
  %v1877 = vmul.f32 %v1870, %v663
  %v1878 = vmul.f32 %v1844, %v667
  %v1879 = vmul.f32 %v1845, %v671
  %v1880 = vmul.f32 %v1846, %v675
  %v1881 = vmul.f32 %v1871, %v663
  %v1882 = vmul.f32 %v1847, %v667
  %v1883 = vmul.f32 %v1848, %v671
  %v1884 = vmul.f32 %v1849, %v675
  %v1885 = vmul.f32 %v1872, %v663
  %v1886 = vmul.f32 %v1850, %v667
  %v1887 = vmul.f32 %v1851, %v671
  %v1888 = vmul.f32 %v1852, %v675
  %1889 = vset.pattern.permute.xlu0 2
  %1890 = vperm.xlu0 %1889, %v1485
  %v1891 = vpop.permute.xlu0 %1890
  %1893 = vset.pattern.permute.xlu0 2
  %1894 = vperm.xlu0 %1893, %v1486
  %v1895 = vpop.permute.xlu0 %1894
  %1897 = vset.pattern.permute.xlu0 2
  %1898 = vperm.xlu0 %1897, %v1487
  %v1899 = vpop.permute.xlu0 %1898
  %1901 = vset.pattern.permute.xlu0 2
  %1902 = vperm.xlu0 %1901, %v1488
  %v1903 = vpop.permute.xlu0 %1902
  %v1905 = vmul.f32 %v1873, %v1891
  %v1906 = vmul.f32 %v1874, %v1891
  %v1907 = vmul.f32 %v1875, %v1891
  %v1908 = vmul.f32 %v1876, %v1891
  %v1909 = vmul.f32 %v1877, %v1895
  %v1910 = vmul.f32 %v1878, %v1895
  %v1911 = vmul.f32 %v1879, %v1895
  %v1912 = vmul.f32 %v1880, %v1895
  %v1913 = vmul.f32 %v1881, %v1899
  %v1914 = vmul.f32 %v1882, %v1899
  %v1915 = vmul.f32 %v1883, %v1899
  %v1916 = vmul.f32 %v1884, %v1899
  %v1917 = vmul.f32 %v1885, %v1903
  %v1918 = vmul.f32 %v1886, %v1903
  %v1919 = vmul.f32 %v1887, %v1903
  %v1920 = vmul.f32 %v1888, %v1903
  %v1921 = vadd.f32 %v1789, %v1905
  %v1922 = vadd.f32 %v1790, %v1906
  %v1923 = vadd.f32 %v1791, %v1907
  %v1924 = vadd.f32 %v1792, %v1908
  %v1925 = vadd.f32 %v1793, %v1909
  %v1926 = vadd.f32 %v1794, %v1910
  %v1927 = vadd.f32 %v1795, %v1911
  %v1928 = vadd.f32 %v1796, %v1912
  %v1929 = vadd.f32 %v1797, %v1913
  %v1930 = vadd.f32 %v1798, %v1914
  %v1931 = vadd.f32 %v1799, %v1915
  %v1932 = vadd.f32 %v1800, %v1916
  %v1933 = vadd.f32 %v1801, %v1917
  %v1934 = vadd.f32 %v1802, %v1918
  %v1935 = vadd.f32 %v1803, %v1919
  %v1936 = vadd.f32 %v1804, %v1920
  %1937 = vrot.lane.b32.xlu0 %v1472, 1
  %v1938 = vpop.permute.xlu0 %1937
  %1939 = vrot.lane.b32.xlu0 %v1476, 1
  %v1940 = vpop.permute.xlu0 %1939
  %1941 = vrot.lane.b32.xlu0 %v1480, 1
  %v1942 = vpop.permute.xlu0 %1941
  %1943 = vrot.lane.b32.xlu0 %v1484, 1
  %v1944 = vpop.permute.xlu0 %1943
  %1949 = vrot.lane.b32.xlu0 %v1469, 1
  %v1950 = vpop.permute.xlu0 %1949
  %1951 = vrot.lane.b32.xlu0 %v1470, 1
  %v1952 = vpop.permute.xlu0 %1951
  %1953 = vrot.lane.b32.xlu0 %v1471, 1
  %v1954 = vpop.permute.xlu0 %1953
  %1955 = vrot.lane.b32.xlu0 %v1473, 1
  %v1956 = vpop.permute.xlu0 %1955
  %1957 = vrot.lane.b32.xlu0 %v1474, 1
  %v1958 = vpop.permute.xlu0 %1957
  %1959 = vrot.lane.b32.xlu0 %v1475, 1
  %v1960 = vpop.permute.xlu0 %1959
  %1961 = vrot.lane.b32.xlu0 %v1477, 1
  %v1962 = vpop.permute.xlu0 %1961
  %1963 = vrot.lane.b32.xlu0 %v1478, 1
  %v1964 = vpop.permute.xlu0 %1963
  %1965 = vrot.lane.b32.xlu0 %v1479, 1
  %v1966 = vpop.permute.xlu0 %1965
  %1967 = vrot.lane.b32.xlu0 %v1481, 1
  %v1968 = vpop.permute.xlu0 %1967
  %1969 = vrot.lane.b32.xlu0 %v1482, 1
  %v1970 = vpop.permute.xlu0 %1969
  %1971 = vrot.lane.b32.xlu0 %v1483, 1
  %v1972 = vpop.permute.xlu0 %1971
  %v1973 = vsel %vm776, %v1950, %v1952
  %v1974 = vsel %vm776, %v1952, %v1954
  %v1975 = vsel %vm776, %v1954, %v1938
  %v1976 = vsel %vm776, %v1956, %v1958
  %v1977 = vsel %vm776, %v1958, %v1960
  %v1978 = vsel %vm776, %v1960, %v1940
  %v1979 = vsel %vm776, %v1962, %v1964
  %v1980 = vsel %vm776, %v1964, %v1966
  %v1981 = vsel %vm776, %v1966, %v1942
  %v1982 = vsel %vm776, %v1968, %v1970
  %v1983 = vsel %vm776, %v1970, %v1972
  %v1984 = vsel %vm776, %v1972, %v1944
  %v2001 = vsel %vm776, %v1938, %v1950
  %v2002 = vsel %vm776, %v1940, %v1956
  %v2003 = vsel %vm776, %v1942, %v1962
  %v2004 = vsel %vm776, %v1944, %v1968
  %v2005 = vmul.f32 %v2001, %v812
  %v2006 = vmul.f32 %v1973, %v816
  %v2007 = vmul.f32 %v1974, %v820
  %v2008 = vmul.f32 %v1975, %v824
  %v2009 = vmul.f32 %v2002, %v812
  %v2010 = vmul.f32 %v1976, %v816
  %v2011 = vmul.f32 %v1977, %v820
  %v2012 = vmul.f32 %v1978, %v824
  %v2013 = vmul.f32 %v2003, %v812
  %v2014 = vmul.f32 %v1979, %v816
  %v2015 = vmul.f32 %v1980, %v820
  %v2016 = vmul.f32 %v1981, %v824
  %v2017 = vmul.f32 %v2004, %v812
  %v2018 = vmul.f32 %v1982, %v816
  %v2019 = vmul.f32 %v1983, %v820
  %v2020 = vmul.f32 %v1984, %v824
  %2021 = vset.pattern.permute.xlu0 3
  %2022 = vperm.xlu0 %2021, %v1485
  %v2023 = vpop.permute.xlu0 %2022
  %2025 = vset.pattern.permute.xlu0 3
  %2026 = vperm.xlu0 %2025, %v1486
  %v2027 = vpop.permute.xlu0 %2026
  %2029 = vset.pattern.permute.xlu0 3
  %2030 = vperm.xlu0 %2029, %v1487
  %v2031 = vpop.permute.xlu0 %2030
  %2033 = vset.pattern.permute.xlu0 3
  %2034 = vperm.xlu0 %2033, %v1488
  %v2035 = vpop.permute.xlu0 %2034
  %v2037 = vmul.f32 %v2005, %v2023
  %v2038 = vmul.f32 %v2006, %v2023
  %v2039 = vmul.f32 %v2007, %v2023
  %v2040 = vmul.f32 %v2008, %v2023
  %v2041 = vmul.f32 %v2009, %v2027
  %v2042 = vmul.f32 %v2010, %v2027
  %v2043 = vmul.f32 %v2011, %v2027
  %v2044 = vmul.f32 %v2012, %v2027
  %v2045 = vmul.f32 %v2013, %v2031
  %v2046 = vmul.f32 %v2014, %v2031
  %v2047 = vmul.f32 %v2015, %v2031
  %v2048 = vmul.f32 %v2016, %v2031
  %v2049 = vmul.f32 %v2017, %v2035
  %v2050 = vmul.f32 %v2018, %v2035
  %v2051 = vmul.f32 %v2019, %v2035
  %v2052 = vmul.f32 %v2020, %v2035
  %v2053 = vadd.f32 %v1921, %v2037
  %v2054 = vadd.f32 %v1922, %v2038
  %v2055 = vadd.f32 %v1923, %v2039
  %v2056 = vadd.f32 %v1924, %v2040
  %v2057 = vadd.f32 %v1925, %v2041
  %v2058 = vadd.f32 %v1926, %v2042
  %v2059 = vadd.f32 %v1927, %v2043
  %v2060 = vadd.f32 %v1928, %v2044
  %v2061 = vadd.f32 %v1929, %v2045
  %v2062 = vadd.f32 %v1930, %v2046
  %v2063 = vadd.f32 %v1931, %v2047
  %v2064 = vadd.f32 %v1932, %v2048
  %v2065 = vadd.f32 %v1933, %v2049
  %v2066 = vadd.f32 %v1934, %v2050
  %v2067 = vadd.f32 %v1935, %v2051
  %v2068 = vadd.f32 %v1936, %v2052
  %2069 = vrot.lane.b32.xlu0 %v1469, 127
  %v2070 = vpop.permute.xlu0 %2069
  %2071 = vrot.lane.b32.xlu0 %v1470, 127
  %v2072 = vpop.permute.xlu0 %2071
  %2073 = vrot.lane.b32.xlu0 %v1471, 127
  %v2074 = vpop.permute.xlu0 %2073
  %2075 = vrot.lane.b32.xlu0 %v1472, 127
  %v2076 = vpop.permute.xlu0 %2075
  %2077 = vrot.lane.b32.xlu0 %v1473, 127
  %v2078 = vpop.permute.xlu0 %2077
  %2079 = vrot.lane.b32.xlu0 %v1474, 127
  %v2080 = vpop.permute.xlu0 %2079
  %2081 = vrot.lane.b32.xlu0 %v1475, 127
  %v2082 = vpop.permute.xlu0 %2081
  %2083 = vrot.lane.b32.xlu0 %v1476, 127
  %v2084 = vpop.permute.xlu0 %2083
  %2085 = vrot.lane.b32.xlu0 %v1477, 127
  %v2086 = vpop.permute.xlu0 %2085
  %2087 = vrot.lane.b32.xlu0 %v1478, 127
  %v2088 = vpop.permute.xlu0 %2087
  %2089 = vrot.lane.b32.xlu0 %v1479, 127
  %v2090 = vpop.permute.xlu0 %2089
  %2091 = vrot.lane.b32.xlu0 %v1480, 127
  %v2092 = vpop.permute.xlu0 %2091
  %2093 = vrot.lane.b32.xlu0 %v1481, 127
  %v2094 = vpop.permute.xlu0 %2093
  %2095 = vrot.lane.b32.xlu0 %v1482, 127
  %v2096 = vpop.permute.xlu0 %2095
  %2097 = vrot.lane.b32.xlu0 %v1483, 127
  %v2098 = vpop.permute.xlu0 %2097
  %2099 = vrot.lane.b32.xlu0 %v1484, 127
  %v2100 = vpop.permute.xlu0 %2099
  %v2101 = vsel %vm921, %v2070, %v2072
  %v2102 = vsel %vm921, %v2072, %v2074
  %v2103 = vsel %vm921, %v2074, %v2076
  %v2104 = vsel %vm921, %v2078, %v2080
  %v2105 = vsel %vm921, %v2080, %v2082
  %v2106 = vsel %vm921, %v2082, %v2084
  %v2107 = vsel %vm921, %v2086, %v2088
  %v2108 = vsel %vm921, %v2088, %v2090
  %v2109 = vsel %vm921, %v2090, %v2092
  %v2110 = vsel %vm921, %v2094, %v2096
  %v2111 = vsel %vm921, %v2096, %v2098
  %v2112 = vsel %vm921, %v2098, %v2100
  %v2133 = vsel %vm921, %v2076, %v2070
  %v2134 = vsel %vm921, %v2084, %v2078
  %v2135 = vsel %vm921, %v2092, %v2086
  %v2136 = vsel %vm921, %v2100, %v2094
  %v2137 = vmul.f32 %v2101, %v961
  %v2138 = vmul.f32 %v2102, %v965
  %v2139 = vmul.f32 %v2103, %v969
  %v2140 = vmul.f32 %v2133, %v973
  %v2141 = vmul.f32 %v2104, %v961
  %v2142 = vmul.f32 %v2105, %v965
  %v2143 = vmul.f32 %v2106, %v969
  %v2144 = vmul.f32 %v2134, %v973
  %v2145 = vmul.f32 %v2107, %v961
  %v2146 = vmul.f32 %v2108, %v965
  %v2147 = vmul.f32 %v2109, %v969
  %v2148 = vmul.f32 %v2135, %v973
  %v2149 = vmul.f32 %v2110, %v961
  %v2150 = vmul.f32 %v2111, %v965
  %v2151 = vmul.f32 %v2112, %v969
  %v2152 = vmul.f32 %v2136, %v973
  %2153 = vset.pattern.permute.xlu0 5
  %2154 = vperm.xlu0 %2153, %v1485
  %v2155 = vpop.permute.xlu0 %2154
  %2157 = vset.pattern.permute.xlu0 5
  %2158 = vperm.xlu0 %2157, %v1486
  %v2159 = vpop.permute.xlu0 %2158
  %2161 = vset.pattern.permute.xlu0 5
  %2162 = vperm.xlu0 %2161, %v1487
  %v2163 = vpop.permute.xlu0 %2162
  %2165 = vset.pattern.permute.xlu0 5
  %2166 = vperm.xlu0 %2165, %v1488
  %v2167 = vpop.permute.xlu0 %2166
  %v2169 = vmul.f32 %v2137, %v2155
  %v2170 = vmul.f32 %v2138, %v2155
  %v2171 = vmul.f32 %v2139, %v2155
  %v2172 = vmul.f32 %v2140, %v2155
  %v2173 = vmul.f32 %v2141, %v2159
  %v2174 = vmul.f32 %v2142, %v2159
  %v2175 = vmul.f32 %v2143, %v2159
  %v2176 = vmul.f32 %v2144, %v2159
  %v2177 = vmul.f32 %v2145, %v2163
  %v2178 = vmul.f32 %v2146, %v2163
  %v2179 = vmul.f32 %v2147, %v2163
  %v2180 = vmul.f32 %v2148, %v2163
  %v2181 = vmul.f32 %v2149, %v2167
  %v2182 = vmul.f32 %v2150, %v2167
  %v2183 = vmul.f32 %v2151, %v2167
  %v2184 = vmul.f32 %v2152, %v2167
  %v2185 = vadd.f32 %v2053, %v2169
  %v2186 = vadd.f32 %v2054, %v2170
  %v2187 = vadd.f32 %v2055, %v2171
  %v2188 = vadd.f32 %v2056, %v2172
  %v2189 = vadd.f32 %v2057, %v2173
  %v2190 = vadd.f32 %v2058, %v2174
  %v2191 = vadd.f32 %v2059, %v2175
  %v2192 = vadd.f32 %v2060, %v2176
  %v2193 = vadd.f32 %v2061, %v2177
  %v2194 = vadd.f32 %v2062, %v2178
  %v2195 = vadd.f32 %v2063, %v2179
  %v2196 = vadd.f32 %v2064, %v2180
  %v2197 = vadd.f32 %v2065, %v2181
  %v2198 = vadd.f32 %v2066, %v2182
  %v2199 = vadd.f32 %v2067, %v2183
  %v2200 = vadd.f32 %v2068, %v2184
  %2201 = vrot.lane.b32.xlu0 %v1469, 113
  %v2202 = vpop.permute.xlu0 %2201
  %2203 = vrot.lane.b32.xlu0 %v1470, 113
  %v2204 = vpop.permute.xlu0 %2203
  %2205 = vrot.lane.b32.xlu0 %v1471, 113
  %v2206 = vpop.permute.xlu0 %2205
  %2207 = vrot.lane.b32.xlu0 %v1472, 113
  %v2208 = vpop.permute.xlu0 %2207
  %2209 = vrot.lane.b32.xlu0 %v1473, 113
  %v2210 = vpop.permute.xlu0 %2209
  %2211 = vrot.lane.b32.xlu0 %v1474, 113
  %v2212 = vpop.permute.xlu0 %2211
  %2213 = vrot.lane.b32.xlu0 %v1475, 113
  %v2214 = vpop.permute.xlu0 %2213
  %2215 = vrot.lane.b32.xlu0 %v1476, 113
  %v2216 = vpop.permute.xlu0 %2215
  %2217 = vrot.lane.b32.xlu0 %v1477, 113
  %v2218 = vpop.permute.xlu0 %2217
  %2219 = vrot.lane.b32.xlu0 %v1478, 113
  %v2220 = vpop.permute.xlu0 %2219
  %2221 = vrot.lane.b32.xlu0 %v1479, 113
  %v2222 = vpop.permute.xlu0 %2221
  %2223 = vrot.lane.b32.xlu0 %v1480, 113
  %v2224 = vpop.permute.xlu0 %2223
  %2225 = vrot.lane.b32.xlu0 %v1481, 113
  %v2226 = vpop.permute.xlu0 %2225
  %2227 = vrot.lane.b32.xlu0 %v1482, 113
  %v2228 = vpop.permute.xlu0 %2227
  %2229 = vrot.lane.b32.xlu0 %v1483, 113
  %v2230 = vpop.permute.xlu0 %2229
  %2231 = vrot.lane.b32.xlu0 %v1484, 113
  %v2232 = vpop.permute.xlu0 %2231
  %v2233 = vsel %vm1070, %v2202, %v2204
  %v2234 = vsel %vm1070, %v2204, %v2206
  %v2235 = vsel %vm1070, %v2206, %v2208
  %v2236 = vsel %vm1070, %v2210, %v2212
  %v2237 = vsel %vm1070, %v2212, %v2214
  %v2238 = vsel %vm1070, %v2214, %v2216
  %v2239 = vsel %vm1070, %v2218, %v2220
  %v2240 = vsel %vm1070, %v2220, %v2222
  %v2241 = vsel %vm1070, %v2222, %v2224
  %v2242 = vsel %vm1070, %v2226, %v2228
  %v2243 = vsel %vm1070, %v2228, %v2230
  %v2244 = vsel %vm1070, %v2230, %v2232
  %v2265 = vsel %vm1070, %v2208, %v2202
  %v2266 = vsel %vm1070, %v2216, %v2210
  %v2267 = vsel %vm1070, %v2224, %v2218
  %v2268 = vsel %vm1070, %v2232, %v2226
  %v2269 = vmul.f32 %v2233, %v1110
  %v2270 = vmul.f32 %v2234, %v1114
  %v2271 = vmul.f32 %v2235, %v1118
  %v2272 = vmul.f32 %v2265, %v1122
  %v2273 = vmul.f32 %v2236, %v1110
  %v2274 = vmul.f32 %v2237, %v1114
  %v2275 = vmul.f32 %v2238, %v1118
  %v2276 = vmul.f32 %v2266, %v1122
  %v2277 = vmul.f32 %v2239, %v1110
  %v2278 = vmul.f32 %v2240, %v1114
  %v2279 = vmul.f32 %v2241, %v1118
  %v2280 = vmul.f32 %v2267, %v1122
  %v2281 = vmul.f32 %v2242, %v1110
  %v2282 = vmul.f32 %v2243, %v1114
  %v2283 = vmul.f32 %v2244, %v1118
  %v2284 = vmul.f32 %v2268, %v1122
  %2285 = vset.pattern.permute.xlu0 6
  %2286 = vperm.xlu0 %2285, %v1485
  %v2287 = vpop.permute.xlu0 %2286
  %2289 = vset.pattern.permute.xlu0 6
  %2290 = vperm.xlu0 %2289, %v1486
  %v2291 = vpop.permute.xlu0 %2290
  %2293 = vset.pattern.permute.xlu0 6
  %2294 = vperm.xlu0 %2293, %v1487
  %v2295 = vpop.permute.xlu0 %2294
  %2297 = vset.pattern.permute.xlu0 6
  %2298 = vperm.xlu0 %2297, %v1488
  %v2299 = vpop.permute.xlu0 %2298
  %v2301 = vmul.f32 %v2269, %v2287
  %v2302 = vmul.f32 %v2270, %v2287
  %v2303 = vmul.f32 %v2271, %v2287
  %v2304 = vmul.f32 %v2272, %v2287
  %v2305 = vmul.f32 %v2273, %v2291
  %v2306 = vmul.f32 %v2274, %v2291
  %v2307 = vmul.f32 %v2275, %v2291
  %v2308 = vmul.f32 %v2276, %v2291
  %v2309 = vmul.f32 %v2277, %v2295
  %v2310 = vmul.f32 %v2278, %v2295
  %v2311 = vmul.f32 %v2279, %v2295
  %v2312 = vmul.f32 %v2280, %v2295
  %v2313 = vmul.f32 %v2281, %v2299
  %v2314 = vmul.f32 %v2282, %v2299
  %v2315 = vmul.f32 %v2283, %v2299
  %v2316 = vmul.f32 %v2284, %v2299
  %v2317 = vadd.f32 %v2185, %v2301
  %v2318 = vadd.f32 %v2186, %v2302
  %v2319 = vadd.f32 %v2187, %v2303
  %v2320 = vadd.f32 %v2188, %v2304
  %v2321 = vadd.f32 %v2189, %v2305
  %v2322 = vadd.f32 %v2190, %v2306
  %v2323 = vadd.f32 %v2191, %v2307
  %v2324 = vadd.f32 %v2192, %v2308
  %v2325 = vadd.f32 %v2193, %v2309
  %v2326 = vadd.f32 %v2194, %v2310
  %v2327 = vadd.f32 %v2195, %v2311
  %v2328 = vadd.f32 %v2196, %v2312
  %v2329 = vadd.f32 %v2197, %v2313
  %v2330 = vadd.f32 %v2198, %v2314
  %v2331 = vadd.f32 %v2199, %v2315
  %v2332 = vadd.f32 %v2200, %v2316
  %2333 = vrot.lane.b32.xlu0 %v1469, 112
  %v2334 = vpop.permute.xlu0 %2333
  %2335 = vrot.lane.b32.xlu0 %v1470, 112
  %v2336 = vpop.permute.xlu0 %2335
  %2337 = vrot.lane.b32.xlu0 %v1471, 112
  %v2338 = vpop.permute.xlu0 %2337
  %2339 = vrot.lane.b32.xlu0 %v1472, 112
  %v2340 = vpop.permute.xlu0 %2339
  %2341 = vrot.lane.b32.xlu0 %v1473, 112
  %v2342 = vpop.permute.xlu0 %2341
  %2343 = vrot.lane.b32.xlu0 %v1474, 112
  %v2344 = vpop.permute.xlu0 %2343
  %2345 = vrot.lane.b32.xlu0 %v1475, 112
  %v2346 = vpop.permute.xlu0 %2345
  %2347 = vrot.lane.b32.xlu0 %v1476, 112
  %v2348 = vpop.permute.xlu0 %2347
  %2349 = vrot.lane.b32.xlu0 %v1477, 112
  %v2350 = vpop.permute.xlu0 %2349
  %2351 = vrot.lane.b32.xlu0 %v1478, 112
  %v2352 = vpop.permute.xlu0 %2351
  %2353 = vrot.lane.b32.xlu0 %v1479, 112
  %v2354 = vpop.permute.xlu0 %2353
  %2355 = vrot.lane.b32.xlu0 %v1480, 112
  %v2356 = vpop.permute.xlu0 %2355
  %2357 = vrot.lane.b32.xlu0 %v1481, 112
  %v2358 = vpop.permute.xlu0 %2357
  %2359 = vrot.lane.b32.xlu0 %v1482, 112
  %v2360 = vpop.permute.xlu0 %2359
  %2361 = vrot.lane.b32.xlu0 %v1483, 112
  %v2362 = vpop.permute.xlu0 %2361
  %2363 = vrot.lane.b32.xlu0 %v1484, 112
  %v2364 = vpop.permute.xlu0 %2363
  %v2365 = vsel %vm1219, %v2334, %v2336
  %v2366 = vsel %vm1219, %v2336, %v2338
  %v2367 = vsel %vm1219, %v2338, %v2340
  %v2368 = vsel %vm1219, %v2342, %v2344
  %v2369 = vsel %vm1219, %v2344, %v2346
  %v2370 = vsel %vm1219, %v2346, %v2348
  %v2371 = vsel %vm1219, %v2350, %v2352
  %v2372 = vsel %vm1219, %v2352, %v2354
  %v2373 = vsel %vm1219, %v2354, %v2356
  %v2374 = vsel %vm1219, %v2358, %v2360
  %v2375 = vsel %vm1219, %v2360, %v2362
  %v2376 = vsel %vm1219, %v2362, %v2364
  %v2397 = vsel %vm1219, %v2340, %v2334
  %v2398 = vsel %vm1219, %v2348, %v2342
  %v2399 = vsel %vm1219, %v2356, %v2350
  %v2400 = vsel %vm1219, %v2364, %v2358
  %v2401 = vmul.f32 %v2365, %v1259
  %v2402 = vmul.f32 %v2366, %v1263
  %v2403 = vmul.f32 %v2367, %v1267
  %v2404 = vmul.f32 %v2397, %v1271
  %v2405 = vmul.f32 %v2368, %v1259
  %v2406 = vmul.f32 %v2369, %v1263
  %v2407 = vmul.f32 %v2370, %v1267
  %v2408 = vmul.f32 %v2398, %v1271
  %v2409 = vmul.f32 %v2371, %v1259
  %v2410 = vmul.f32 %v2372, %v1263
  %v2411 = vmul.f32 %v2373, %v1267
  %v2412 = vmul.f32 %v2399, %v1271
  %v2413 = vmul.f32 %v2374, %v1259
  %v2414 = vmul.f32 %v2375, %v1263
  %v2415 = vmul.f32 %v2376, %v1267
  %v2416 = vmul.f32 %v2400, %v1271
  %2417 = vset.pattern.permute.xlu0 7
  %2418 = vperm.xlu0 %2417, %v1485
  %v2419 = vpop.permute.xlu0 %2418
  %2421 = vset.pattern.permute.xlu0 7
  %2422 = vperm.xlu0 %2421, %v1486
  %v2423 = vpop.permute.xlu0 %2422
  %2425 = vset.pattern.permute.xlu0 7
  %2426 = vperm.xlu0 %2425, %v1487
  %v2427 = vpop.permute.xlu0 %2426
  %2429 = vset.pattern.permute.xlu0 7
  %2430 = vperm.xlu0 %2429, %v1488
  %v2431 = vpop.permute.xlu0 %2430
  %v2433 = vmul.f32 %v2401, %v2419
  %v2434 = vmul.f32 %v2402, %v2419
  %v2435 = vmul.f32 %v2403, %v2419
  %v2436 = vmul.f32 %v2404, %v2419
  %v2437 = vmul.f32 %v2405, %v2423
  %v2438 = vmul.f32 %v2406, %v2423
  %v2439 = vmul.f32 %v2407, %v2423
  %v2440 = vmul.f32 %v2408, %v2423
  %v2441 = vmul.f32 %v2409, %v2427
  %v2442 = vmul.f32 %v2410, %v2427
  %v2443 = vmul.f32 %v2411, %v2427
  %v2444 = vmul.f32 %v2412, %v2427
  %v2445 = vmul.f32 %v2413, %v2431
  %v2446 = vmul.f32 %v2414, %v2431
  %v2447 = vmul.f32 %v2415, %v2431
  %v2448 = vmul.f32 %v2416, %v2431
  %v2449 = vadd.f32 %v2317, %v2433
  %v2450 = vadd.f32 %v2318, %v2434
  %v2451 = vadd.f32 %v2319, %v2435
  %v2452 = vadd.f32 %v2320, %v2436
  %v2453 = vadd.f32 %v2321, %v2437
  %v2454 = vadd.f32 %v2322, %v2438
  %v2455 = vadd.f32 %v2323, %v2439
  %v2456 = vadd.f32 %v2324, %v2440
  %v2457 = vadd.f32 %v2325, %v2441
  %v2458 = vadd.f32 %v2326, %v2442
  %v2459 = vadd.f32 %v2327, %v2443
  %v2460 = vadd.f32 %v2328, %v2444
  %v2461 = vadd.f32 %v2329, %v2445
  %v2462 = vadd.f32 %v2330, %v2446
  %v2463 = vadd.f32 %v2331, %v2447
  %v2464 = vadd.f32 %v2332, %v2448
  %2465 = vrot.lane.b32.xlu0 %v1469, 111
  %v2466 = vpop.permute.xlu0 %2465
  %2467 = vrot.lane.b32.xlu0 %v1470, 111
  %v2468 = vpop.permute.xlu0 %2467
  %2469 = vrot.lane.b32.xlu0 %v1471, 111
  %v2470 = vpop.permute.xlu0 %2469
  %2471 = vrot.lane.b32.xlu0 %v1472, 111
  %v2472 = vpop.permute.xlu0 %2471
  %2473 = vrot.lane.b32.xlu0 %v1473, 111
  %v2474 = vpop.permute.xlu0 %2473
  %2475 = vrot.lane.b32.xlu0 %v1474, 111
  %v2476 = vpop.permute.xlu0 %2475
  %2477 = vrot.lane.b32.xlu0 %v1475, 111
  %v2478 = vpop.permute.xlu0 %2477
  %2479 = vrot.lane.b32.xlu0 %v1476, 111
  %v2480 = vpop.permute.xlu0 %2479
  %2481 = vrot.lane.b32.xlu0 %v1477, 111
  %v2482 = vpop.permute.xlu0 %2481
  %2483 = vrot.lane.b32.xlu0 %v1478, 111
  %v2484 = vpop.permute.xlu0 %2483
  %2485 = vrot.lane.b32.xlu0 %v1479, 111
  %v2486 = vpop.permute.xlu0 %2485
  %2487 = vrot.lane.b32.xlu0 %v1480, 111
  %v2488 = vpop.permute.xlu0 %2487
  %2489 = vrot.lane.b32.xlu0 %v1481, 111
  %v2490 = vpop.permute.xlu0 %2489
  %2491 = vrot.lane.b32.xlu0 %v1482, 111
  %v2492 = vpop.permute.xlu0 %2491
  %2493 = vrot.lane.b32.xlu0 %v1483, 111
  %v2494 = vpop.permute.xlu0 %2493
  %2495 = vrot.lane.b32.xlu0 %v1484, 111
  %v2496 = vpop.permute.xlu0 %2495
  %v2497 = vsel %vm1368, %v2466, %v2468
  %v2498 = vsel %vm1368, %v2468, %v2470
  %v2499 = vsel %vm1368, %v2470, %v2472
  %v2500 = vsel %vm1368, %v2474, %v2476
  %v2501 = vsel %vm1368, %v2476, %v2478
  %v2502 = vsel %vm1368, %v2478, %v2480
  %v2503 = vsel %vm1368, %v2482, %v2484
  %v2504 = vsel %vm1368, %v2484, %v2486
  %v2505 = vsel %vm1368, %v2486, %v2488
  %v2506 = vsel %vm1368, %v2490, %v2492
  %v2507 = vsel %vm1368, %v2492, %v2494
  %v2508 = vsel %vm1368, %v2494, %v2496
  %v2529 = vsel %vm1368, %v2472, %v2466
  %v2530 = vsel %vm1368, %v2480, %v2474
  %v2531 = vsel %vm1368, %v2488, %v2482
  %v2532 = vsel %vm1368, %v2496, %v2490
  %v2533 = vmul.f32 %v2497, %v1408
  %v2534 = vmul.f32 %v2498, %v1412
  %v2535 = vmul.f32 %v2499, %v1416
  %v2536 = vmul.f32 %v2529, %v1420
  %v2537 = vmul.f32 %v2500, %v1408
  %v2538 = vmul.f32 %v2501, %v1412
  %v2539 = vmul.f32 %v2502, %v1416
  %v2540 = vmul.f32 %v2530, %v1420
  %v2541 = vmul.f32 %v2503, %v1408
  %v2542 = vmul.f32 %v2504, %v1412
  %v2543 = vmul.f32 %v2505, %v1416
  %v2544 = vmul.f32 %v2531, %v1420
  %v2545 = vmul.f32 %v2506, %v1408
  %v2546 = vmul.f32 %v2507, %v1412
  %v2547 = vmul.f32 %v2508, %v1416
  %v2548 = vmul.f32 %v2532, %v1420
  %2549 = vset.pattern.permute.xlu0 8
  %2550 = vperm.xlu0 %2549, %v1485
  %v2551 = vpop.permute.xlu0 %2550
  %2553 = vset.pattern.permute.xlu0 8
  %2554 = vperm.xlu0 %2553, %v1486
  %v2555 = vpop.permute.xlu0 %2554
  %2557 = vset.pattern.permute.xlu0 8
  %2558 = vperm.xlu0 %2557, %v1487
  %v2559 = vpop.permute.xlu0 %2558
  %2561 = vset.pattern.permute.xlu0 8
  %2562 = vperm.xlu0 %2561, %v1488
  %v2563 = vpop.permute.xlu0 %2562
  %v2565 = vmul.f32 %v2533, %v2551
  %v2566 = vmul.f32 %v2534, %v2551
  %v2567 = vmul.f32 %v2535, %v2551
  %v2568 = vmul.f32 %v2536, %v2551
  %v2569 = vmul.f32 %v2537, %v2555
  %v2570 = vmul.f32 %v2538, %v2555
  %v2571 = vmul.f32 %v2539, %v2555
  %v2572 = vmul.f32 %v2540, %v2555
  %v2573 = vmul.f32 %v2541, %v2559
  %v2574 = vmul.f32 %v2542, %v2559
  %v2575 = vmul.f32 %v2543, %v2559
  %v2576 = vmul.f32 %v2544, %v2559
  %v2577 = vmul.f32 %v2545, %v2563
  %v2578 = vmul.f32 %v2546, %v2563
  %v2579 = vmul.f32 %v2547, %v2563
  %v2580 = vmul.f32 %v2548, %v2563
  %v2581 = vadd.f32 %v2449, %v2565
  %v2582 = vadd.f32 %v2450, %v2566
  %v2583 = vadd.f32 %v2451, %v2567
  %v2584 = vadd.f32 %v2452, %v2568
  %v2585 = vadd.f32 %v2453, %v2569
  %v2586 = vadd.f32 %v2454, %v2570
  %v2587 = vadd.f32 %v2455, %v2571
  %v2588 = vadd.f32 %v2456, %v2572
  %v2589 = vadd.f32 %v2457, %v2573
  %v2590 = vadd.f32 %v2458, %v2574
  %v2591 = vadd.f32 %v2459, %v2575
  %v2592 = vadd.f32 %v2460, %v2576
  %v2593 = vadd.f32 %v2461, %v2577
  %v2594 = vadd.f32 %v2462, %v2578
  %v2595 = vadd.f32 %v2463, %v2579
  %v2596 = vadd.f32 %v2464, %v2580
  %v2597 = vtanh.pop %v2581
  %v2598 = vtanh.pop %v2582
  %v2599 = vtanh.pop %v2583
  %v2600 = vtanh.pop %v2584
  %v2601 = vtanh.pop %v2585
  %v2602 = vtanh.pop %v2586
  %v2603 = vtanh.pop %v2587
  %v2604 = vtanh.pop %v2588
  %v2605 = vtanh.pop %v2589
  %v2606 = vtanh.pop %v2590
  %v2607 = vtanh.pop %v2591
  %v2608 = vtanh.pop %v2592
  %v2609 = vtanh.pop %v2593
  %v2610 = vtanh.pop %v2594
  %v2611 = vtanh.pop %v2595
  %v2612 = vtanh.pop %v2596
  %v2613 = vadd.f32 %v2597, %v1469
  %v2614 = vadd.f32 %v2598, %v1470
  %v2615 = vadd.f32 %v2599, %v1471
  %v2616 = vadd.f32 %v2600, %v1472
  %v2617 = vadd.f32 %v2601, %v1473
  %v2618 = vadd.f32 %v2602, %v1474
  %v2619 = vadd.f32 %v2603, %v1475
  %v2620 = vadd.f32 %v2604, %v1476
  %v2621 = vadd.f32 %v2605, %v1477
  %v2622 = vadd.f32 %v2606, %v1478
  %v2623 = vadd.f32 %v2607, %v1479
  %v2624 = vadd.f32 %v2608, %v1480
  %v2625 = vadd.f32 %v2609, %v1481
  %v2626 = vadd.f32 %v2610, %v1482
  %v2627 = vadd.f32 %v2611, %v1483
  %v2628 = vadd.f32 %v2612, %v1484
  %v2629 = vmul.f32 %v2613, %v2621
  %v2630 = vmul.f32 %v2614, %v2622
  %v2631 = vmul.f32 %v2615, %v2623
  %v2632 = vmul.f32 %v2616, %v2624
  %v2633 = vmul.f32 %v2617, %v2625
  %v2634 = vmul.f32 %v2618, %v2626
  %v2635 = vmul.f32 %v2619, %v2627
  %v2636 = vmul.f32 %v2620, %v2628
  %v2637 = vld [vmem:[%s5] sm:$0xf]
  %v2639 = vsel %vm478, %v2637, 0
  %2641 = vmatprep.subr.mxu0 %v2630
  %2642 = vmatpush1.msra.mxu0 %v2629
  %2643 = vmatprep.subr.mxu0 %v2634
  %2644 = vmatpush1.msra.mxu0 %v2633
  %2645 = vmatprep.subr.mxu0 0.0
  %2646 = vmatpush1.msra.mxu0 0.0
  %2647 = vmatprep.subr.mxu0 0.0
  %2648 = vmatpush1.msra.mxu0 0.0
  %2649 = vmatprep.subr.mxu0 0.0
  %2650 = vmatpush1.msra.mxu0 0.0
  %2651 = vmatprep.subr.mxu0 0.0
  %2652 = vmatpush1.msra.mxu0 0.0
  %2653 = vmatprep.subr.mxu0 0.0
  %2654 = vmatpush1.msra.mxu0 0.0
  %2655 = vmatprep.subr.mxu0 0.0
  %2656 = vmatpush1.msra.mxu0 0.0
  %2657 = vmatprep.subr.mxu0 0.0
  %2658 = vmatpush1.msra.mxu0 0.0
  %2659 = vmatprep.subr.mxu0 0.0
  %2660 = vmatpush1.msra.mxu0 0.0
  %2661 = vmatprep.subr.mxu0 0.0
  %2662 = vmatpush1.msra.mxu0 0.0
  %2663 = vmatprep.subr.mxu0 0.0
  %2664 = vmatpush1.msra.mxu0 0.0
  %2665 = vmatprep.subr.mxu0 0.0
  %2666 = vmatpush1.msra.mxu0 0.0
  %2667 = vmatprep.subr.mxu0 0.0
  %2668 = vmatpush1.msra.mxu0 0.0
  %2669 = vmatprep.subr.mxu0 0.0
  %2670 = vmatpush1.msra.mxu0 0.0
  %2671 = vmatprep.subr.mxu0 0.0
  %2672 = vmatpush1.msra.mxu0 0.0
  %2673 = vmatprep.subr.mxu0 0.0
  %2674 = vmatpush1.msra.mxu0 0.0
  %2675 = vmatprep.subr.mxu0 0.0
  %2676 = vmatpush1.msra.mxu0 0.0
  %2677 = vmatprep.subr.mxu0 0.0
  %2678 = vmatpush1.msra.mxu0 0.0
  %2679 = vmatprep.subr.mxu0 0.0
  %2680 = vmatpush1.msra.mxu0 0.0
  %2681 = vmatprep.subr.mxu0 0.0
  %2682 = vmatpush1.msra.mxu0 0.0
  %2683 = vmatprep.subr.mxu0 0.0
  %2684 = vmatpush1.msra.mxu0 0.0
  %2685 = vmatprep.subr.mxu0 0.0
  %2686 = vmatpush1.msra.mxu0 0.0
  %2687 = vmatprep.subr.mxu0 0.0
  %2688 = vmatpush1.msra.mxu0 0.0
  %2689 = vmatprep.subr.mxu0 0.0
  %2690 = vmatpush1.msra.mxu0 0.0
  %2691 = vmatprep.subr.mxu0 0.0
  %2692 = vmatpush1.msra.mxu0 0.0
  %2693 = vmatprep.subr.mxu0 0.0
  %2694 = vmatpush1.msra.mxu0 0.0
  %2695 = vmatprep.subr.mxu0 0.0
  %2696 = vmatpush1.msra.mxu0 0.0
  %2697 = vmatprep.subr.mxu0 0.0
  %2698 = vmatpush1.msra.mxu0 0.0
  %2699 = vmatprep.subr.mxu0 0.0
  %2700 = vmatpush1.msra.mxu0 0.0
  %2701 = vmatprep.subr.mxu0 0.0
  %2702 = vmatpush1.msra.mxu0 0.0
  %2703 = vmatprep.subr.mxu0 0.0
  %2704 = vmatpush1.msra.mxu0 0.0
  %2705 = vmatprep.mubr.f32.mxu0 0.0
  %2706 = vmatmul.mubr.f32.gmra.mrb[0].mxu0 %v2639
  %v2707 = vpop.f32.mrb[0].mxu0
  %v2708 = vadd.f32 0.0, %v2707
  %v2709 = vpop.f32.mrb[0].mxu0
  %v2710 = vadd.f32 0.0, %v2709
  %2711 = vdwg.mxu0
  %2712 = vmatprep.subr.mxu0 %v2632
  %2713 = vmatpush1.msra.mxu0 %v2631
  %2714 = vmatprep.subr.mxu0 %v2636
  %2715 = vmatpush1.msra.mxu0 %v2635
  %2716 = vmatprep.subr.mxu0 0.0
  %2717 = vmatpush1.msra.mxu0 0.0
  %2718 = vmatprep.subr.mxu0 0.0
  %2719 = vmatpush1.msra.mxu0 0.0
  %2720 = vmatprep.subr.mxu0 0.0
  %2721 = vmatpush1.msra.mxu0 0.0
  %2722 = vmatprep.subr.mxu0 0.0
  %2723 = vmatpush1.msra.mxu0 0.0
  %2724 = vmatprep.subr.mxu0 0.0
  %2725 = vmatpush1.msra.mxu0 0.0
  %2726 = vmatprep.subr.mxu0 0.0
  %2727 = vmatpush1.msra.mxu0 0.0
  %2728 = vmatprep.subr.mxu0 0.0
  %2729 = vmatpush1.msra.mxu0 0.0
  %2730 = vmatprep.subr.mxu0 0.0
  %2731 = vmatpush1.msra.mxu0 0.0
  %2732 = vmatprep.subr.mxu0 0.0
  %2733 = vmatpush1.msra.mxu0 0.0
  %2734 = vmatprep.subr.mxu0 0.0
  %2735 = vmatpush1.msra.mxu0 0.0
  %2736 = vmatprep.subr.mxu0 0.0
  %2737 = vmatpush1.msra.mxu0 0.0
  %2738 = vmatprep.subr.mxu0 0.0
  %2739 = vmatpush1.msra.mxu0 0.0
  %2740 = vmatprep.subr.mxu0 0.0
  %2741 = vmatpush1.msra.mxu0 0.0
  %2742 = vmatprep.subr.mxu0 0.0
  %2743 = vmatpush1.msra.mxu0 0.0
  %2744 = vmatprep.subr.mxu0 0.0
  %2745 = vmatpush1.msra.mxu0 0.0
  %2746 = vmatprep.subr.mxu0 0.0
  %2747 = vmatpush1.msra.mxu0 0.0
  %2748 = vmatprep.subr.mxu0 0.0
  %2749 = vmatpush1.msra.mxu0 0.0
  %2750 = vmatprep.subr.mxu0 0.0
  %2751 = vmatpush1.msra.mxu0 0.0
  %2752 = vmatprep.subr.mxu0 0.0
  %2753 = vmatpush1.msra.mxu0 0.0
  %2754 = vmatprep.subr.mxu0 0.0
  %2755 = vmatpush1.msra.mxu0 0.0
  %2756 = vmatprep.subr.mxu0 0.0
  %2757 = vmatpush1.msra.mxu0 0.0
  %2758 = vmatprep.subr.mxu0 0.0
  %2759 = vmatpush1.msra.mxu0 0.0
  %2760 = vmatprep.subr.mxu0 0.0
  %2761 = vmatpush1.msra.mxu0 0.0
  %2762 = vmatprep.subr.mxu0 0.0
  %2763 = vmatpush1.msra.mxu0 0.0
  %2764 = vmatprep.subr.mxu0 0.0
  %2765 = vmatpush1.msra.mxu0 0.0
  %2766 = vmatprep.subr.mxu0 0.0
  %2767 = vmatpush1.msra.mxu0 0.0
  %2768 = vmatprep.subr.mxu0 0.0
  %2769 = vmatpush1.msra.mxu0 0.0
  %2770 = vmatprep.subr.mxu0 0.0
  %2771 = vmatpush1.msra.mxu0 0.0
  %2772 = vmatprep.subr.mxu0 0.0
  %2773 = vmatpush1.msra.mxu0 0.0
  %2774 = vmatprep.subr.mxu0 0.0
  %2775 = vmatpush1.msra.mxu0 0.0
  %2776 = vmatprep.mubr.f32.mxu0 0.0
  %2777 = vmatmul.mubr.f32.gmra.mrb[0].mxu0 %v2639
  %v2778 = vpop.f32.mrb[0].mxu0
  %v2779 = vadd.f32 0.0, %v2778
  %v2780 = vpop.f32.mrb[0].mxu0
  %v2781 = vadd.f32 0.0, %v2780
  %2782 = vdwg.mxu0
  %v2787 = vcombine.low %v2708, %v2710
  %v2788 = vcombine.low %v2779, %v2781
  %2791 = vst [vmem:[%s6] sm:$0xff] %v2787
  %2792 = vst [vmem:[%s6 + $0x8] sm:$0xff] %v2788
  // Predicated region
  $region26: #{iel_forward.1} parent=0 // pred_check
    _
  $region27: #{iel_forward.1} parent=0 // pred_check_branch
    %2794 = sbr.rel (0) target = $region29
  $region28: #{iel_forward.1} parent=0 // pred_region
    _
  $region29: #{iel_forward.1} parent=0 // pred_fallthru
    _
  // Predicated region
  $region30: #{iel_forward.1} parent=0 // pred_check
    _
  $region31: #{iel_forward.1} parent=0 // pred_check_branch
    %2796 = sbr.rel (0) target = $region33
  $region32: #{iel_forward.1} parent=0 // pred_region
    _
  $region33: #{iel_forward.1} parent=0 // pred_fallthru
    _

</llo_original>
